<compile_context>
chip_gen: v7x
topology: tpu7x:2x2x1
jax: 0.10.0
libtpu: 0.0.40
codegen_flags: <defaults>
</compile_context>

<pallas_src>
import functools

import jax
import jax.numpy as jnp
import numpy as np
from jax import lax
from jax.experimental import pallas as pl
from jax.experimental.pallas import tpu as pltpu

BN_EPS = 1e-5
LANE = 128


def _round_up(x, m):
    return ((x + m - 1) // m) * m


@functools.lru_cache(maxsize=None)
def _vmem_limit_bytes():
    """Generation-aware scoped-VMEM cap (conservative on v7x's 64 MiB/TC)."""
    try:
        cap = int(pltpu.get_tpu_info().vmem_capacity_bytes)
    except Exception:  # query unavailable -> safe-everywhere default
        cap = 64 * 1024 * 1024
    if cap >= 128 * 1024 * 1024:        # v5e / v6e
        return 96 * 1024 * 1024
    return 48 * 1024 * 1024             # v7x (64 MiB physical per TensorCore)


# ----------------------------- kernel bodies --------------------------------

def _row_mask(tile_n, n_real):
    """Boolean (tile_n, 1) mask of rows that belong to the real batch."""
    rows = pl.program_id(0) * tile_n + lax.broadcasted_iota(
        jnp.int32, (tile_n, 1), 0)
    return rows < n_real


def _packed_stats(y_f32, mask):
    """(1, 2, H) stacked [sum; sum-of-squares] over the (masked) tile rows."""
    ym = y_f32 if mask is None else jnp.where(mask, y_f32, 0.0)
    s = jnp.sum(ym, axis=0, keepdims=True)
    sq = jnp.sum(ym * ym, axis=0, keepdims=True)
    return jnp.concatenate([s, sq], axis=0)[None]


def make_fc1_kernel(store_dtype):
    def kernel(x_ref, w_ref, y_ref, st_ref):
        w = w_ref[...]
        y = jnp.dot(x_ref[...].astype(w.dtype), w,
                    preferred_element_type=jnp.float32)
        y_st = y.astype(store_dtype)
        y_ref[...] = y_st
        # Padded input rows are exactly zero -> y1 padded rows are zero, so no
        # row mask is needed for the pass-1 stats.
        st_ref[...] = _packed_stats(y_st.astype(jnp.float32), None)
    return kernel


def make_fc2_kernel(n_real, tile_n, store_dtype):
    def kernel(y1_ref, a1_ref, c1_ref, w_ref, y2_ref, st_ref):
        # Folded BN (scale+shift) + ReLU, then next Linear.  x1 is NOT written
        # back to HBM; pass 3 recomputes it from (y1, a1, c1).
        x1 = jnp.maximum(y1_ref[...] * a1_ref[...] + c1_ref[...], 0.0)
        w = w_ref[...]
        y2 = jnp.dot(x1.astype(w.dtype), w, preferred_element_type=jnp.float32)
        y2_st = y2.astype(store_dtype)
        y2_ref[...] = y2_st
        st_ref[...] = _packed_stats(y2_st.astype(jnp.float32),
                                    _row_mask(tile_n, n_real))
    return kernel


def make_se_fc3_kernel(n_real, tile_n, store_dtype):
    def kernel(y1_ref, a1_ref, c1_ref, y2_ref, a2_ref, c2_ref,
               sw1a_ref, sw1b_ref, sb1_ref,
               sw2a_ref, sw2b_ref, sb2a_ref, sb2b_ref,
               w3a_ref, w3b_ref,
               y3_ref, st_ref):
        # Recompute x1 = relu(bn(y1)) instead of re-reading a stored x1.
        x1 = jnp.maximum(y1_ref[...] * a1_ref[...] + c1_ref[...], 0.0)
        x2 = jnp.maximum(y2_ref[...] * a2_ref[...] + c2_ref[...], 0.0)
        cdt = sw1a_ref.dtype
        x1c = x1.astype(cdt)
        x2c = x2.astype(cdt)
        # Squeeze-excite on the *virtual* concat [x1, x2]: weights are pre-split
        # in the wrapper, so no lane-axis concatenate is materialized.
        h = (jnp.dot(x1c, sw1a_ref[...], preferred_element_type=jnp.float32)
             + jnp.dot(x2c, sw1b_ref[...], preferred_element_type=jnp.float32)
             + sb1_ref[...])
        h = jnp.maximum(h, 0.0).astype(cdt)
        s1 = jax.nn.sigmoid(
            jnp.dot(h, sw2a_ref[...], preferred_element_type=jnp.float32)
            + sb2a_ref[...])
        s2 = jax.nn.sigmoid(
            jnp.dot(h, sw2b_ref[...], preferred_element_type=jnp.float32)
            + sb2b_ref[...])
        g1 = (s1 * x1).astype(cdt)
        g2 = (s2 * x2).astype(cdt)
        y3 = (jnp.dot(g1, w3a_ref[...], preferred_element_type=jnp.float32)
              + jnp.dot(g2, w3b_ref[...], preferred_element_type=jnp.float32))
        y3_st = y3.astype(store_dtype)
        y3_ref[...] = y3_st
        st_ref[...] = _packed_stats(y3_st.astype(jnp.float32),
                                    _row_mask(tile_n, n_real))
    return kernel


def bn_relu_kernel(y_ref, a_ref, c_ref, o_ref):
    o_ref[...] = jnp.maximum(
        y_ref[...] * a_ref[...] + c_ref[...], 0.0).astype(o_ref.dtype)


# ------------------------------ host wrapper --------------------------------

def _bn_fold(stats, gamma, beta, n_real):
    """Reduce per-tile packed stats, fold BN into y*a + c (training-mode)."""
    tot = jnp.sum(stats, axis=0)              # (2, Hp)
    mean = tot[0:1] / n_real                  # (1, Hp)
    ex2 = tot[1:2] / n_real
    var = jnp.maximum(ex2 - mean * mean, 0.0)
    a = gamma * lax.rsqrt(var + BN_EPS)
    c = beta - mean * a
    return a, c


def node_emb_forward(x, params, *, compute_dtype=jnp.float32, tile_n=None,
                     return_padded=False):
    n, d_in = x.shape
    hidden = params["w1"].shape[1]
    hq = (2 * hidden) // 4

    d_in_p = _round_up(d_in, LANE)
    h_p = _round_up(hidden, LANE)
    hq_p = _round_up(hq, LANE)

    f32 = jnp.float32
    cdt = compute_dtype
    # Inter-pass row tensors are stored in bf16 on the bf16 fast path (v6e/v7x),
    # halving the dominant HBM byte stream of the mem-bound passes.
    store_dtype = jnp.bfloat16 if cdt == jnp.bfloat16 else f32
    min_rows = 16 if store_dtype == jnp.bfloat16 else 8   # sublane packing

    # Row tile: as large as reasonable (HBM roofline), but keep >= 2 grid steps
    # whenever possible so the "parallel" axis can split across v7x's 2 TCs.
    if tile_n is None:
        cap = 512
        if n >= 2 * cap:
            tile_n = cap
        elif n > min_rows:
            tile_n = min(cap, _round_up((n + 1) // 2, min_rows))
        else:
            tile_n = min_rows
    tile_n = _round_up(tile_n, min_rows)
    n_p = _round_up(n, tile_n)
    num_tiles = n_p // tile_n

    def pad2(w, r, c, dtype=f32):
        w = w.astype(f32)
        return jnp.pad(w, ((0, r - w.shape[0]), (0, c - w.shape[1]))).astype(dtype)

    # Input: pad rows to a tile multiple and features to a lane multiple; cast
    # to the MXU operand dtype in the wrapper (halves pass-1 reads for bf16).
    x_p = pad2(x, n_p, d_in_p, cdt)

    # Weights: pad to lane-friendly shapes; matmul operands in compute dtype.
    # Zero-padded gamma/beta keep padded lanes exactly 0 through all layers.
    w1 = pad2(params["w1"], d_in_p, h_p, cdt)
    g1 = pad2(params["g1"], 1, h_p)
    b1 = pad2(params["b1"], 1, h_p)
    w2 = pad2(params["w2"], h_p, h_p, cdt)
    g2 = pad2(params["g2"], 1, h_p)
    b2 = pad2(params["b2"], 1, h_p)
    # SE / fc3 weights split so the kernel never concatenates [x1, x2].
    sw1a = pad2(params["se_w1"][:hidden], h_p, hq_p, cdt)
    sw1b = pad2(params["se_w1"][hidden:], h_p, hq_p, cdt)
    sb1 = pad2(params["se_b1"], 1, hq_p)
    sw2a = pad2(params["se_w2"][:, :hidden], hq_p, h_p, cdt)
    sw2b = pad2(params["se_w2"][:, hidden:], hq_p, h_p, cdt)
    sb2a = pad2(params["se_b2"][:, :hidden], 1, h_p)
    sb2b = pad2(params["se_b2"][:, hidden:], 1, h_p)
    w3a = pad2(params["w3"][:hidden], h_p, h_p, cdt)
    w3b = pad2(params["w3"][hidden:], h_p, h_p, cdt)
    g3 = pad2(params["g3"], 1, h_p)
    b3 = pad2(params["b3"], 1, h_p)

    grid = (num_tiles,)
    cp = pltpu.CompilerParams(
        dimension_semantics=("parallel",),
        vmem_limit_bytes=_vmem_limit_bytes(),
    )

    def row_spec(width, tile=tile_n):
        return pl.BlockSpec((tile, width), lambda i: (i, 0))

    def full_spec(shape):
        # Grid-invariant operand (weights / folded BN scale+shift).
        return pl.BlockSpec(shape, lambda i: (0,) * len(shape))

    # One packed stats output per pass: [sum; sum-of-squares] stacked.
    stats_spec = pl.BlockSpec((1, 2, h_p), lambda i: (i, 0, 0))
    stats_shape = jax.ShapeDtypeStruct((num_tiles, 2, h_p), f32)
    rows_shape = jax.ShapeDtypeStruct((n_p, h_p), store_dtype)

    # ---- pass 1: y1 = x @ W1 (+ batch stats of y1) --------------------------
    y1, st1 = pl.pallas_call(
        make_fc1_kernel(store_dtype),
        grid=grid,
        in_specs=[row_spec(d_in_p), full_spec((d_in_p, h_p))],
        out_specs=(row_spec(h_p), stats_spec),
        out_shape=(rows_shape, stats_shape),
        compiler_params=cp,
    )(x_p, w1)
    a1, c1 = _bn_fold(st1, g1, b1, n)

    # ---- pass 2: x1 = relu(bn(y1)); y2 = x1 @ W2 (+ stats of y2) ------------
    y2, st2 = pl.pallas_call(
        make_fc2_kernel(n, tile_n, store_dtype),
        grid=grid,
        in_specs=[row_spec(h_p), full_spec((1, h_p)), full_spec((1, h_p)),
                  full_spec((h_p, h_p))],
        out_specs=(row_spec(h_p), stats_spec),
        out_shape=(rows_shape, stats_shape),
        compiler_params=cp,
    )(y1, a1, c1, w2)
    a2, c2 = _bn_fold(st2, g2, b2, n)

    # ---- pass 3: x2 = relu(bn(y2)); SE gate; y3 = gated @ W3 (+ stats) ------
    y3, st3 = pl.pallas_call(
        make_se_fc3_kernel(n, tile_n, store_dtype),
        grid=grid,
        in_specs=[row_spec(h_p), full_spec((1, h_p)), full_spec((1, h_p)),
                  row_spec(h_p), full_spec((1, h_p)), full_spec((1, h_p)),
                  full_spec((h_p, hq_p)), full_spec((h_p, hq_p)),
                  full_spec((1, hq_p)),
                  full_spec((hq_p, h_p)), full_spec((hq_p, h_p)),
                  full_spec((1, h_p)), full_spec((1, h_p)),
                  full_spec((h_p, h_p)), full_spec((h_p, h_p))],
        out_specs=(row_spec(h_p), stats_spec),
        out_shape=(rows_shape, stats_shape),
        compiler_params=cp,
    )(y1, a1, c1, y2, a2, c2, sw1a, sw1b, sb1, sw2a, sw2b, sb2a, sb2b, w3a, w3b)
    a3, c3 = _bn_fold(st3, g3, b3, n)

    # ---- pass 4: out = relu(bn(y3)) — pure streaming, use a bigger tile -----
    cap4 = 2048
    if num_tiles >= 2:
        cap4 = min(cap4, n_p // 2)   # keep >= 2 grid steps for megacore
    tile4 = tile_n
    while tile4 * 2 <= min(n_p, max(cap4, tile_n)) and n_p % (tile4 * 2) == 0:
        tile4 *= 2
    out = pl.pallas_call(
        bn_relu_kernel,
        grid=(n_p // tile4,),
        in_specs=[row_spec(h_p, tile4), full_spec((1, h_p)), full_spec((1, h_p))],
        out_specs=row_spec(h_p, tile4),
        out_shape=jax.ShapeDtypeStruct((n_p, h_p), f32),
        compiler_params=cp,
    )(y3, a3, c3)

    if return_padded:
        # Lane-dense padded hand-off; real result is out[:n, :hidden].
        return out
    return out[:n, :hidden]


# ------------------------------ reference / demo ------------------------------

def node_emb_reference(x, p):
    """Pure-JAX f32 reference of the PyTorch forward (training-mode BN)."""
    def lbr(inp, w, g, b):
        y = inp @ w
        mean = y.mean(axis=0, keepdims=True)
        var = ((y - mean) ** 2).mean(axis=0, keepdims=True)
        y = (y - mean) / jnp.sqrt(var + BN_EPS) * g + b
        return jnp.maximum(y, 0.0)

    x1 = lbr(x, p["w1"], p["g1"], p["b1"])
    x2 = lbr(x1, p["w2"], p["g2"], p["b2"])
    xc = jnp.concatenate([x1, x2], axis=-1)
    h = jnp.maximum(xc @ p["se_w1"] + p["se_b1"], 0.0)
    s = jax.nn.sigmoid(h @ p["se_w2"] + p["se_b2"])
    xg = s * xc
    return lbr(xg, p["w3"], p["g3"], p["b3"])


def make_params(key, hidden):
    hc = hidden * 2
    hq = hc // 4
    ks = jax.random.split(key, 12)
    scale = 0.1
    return {
        # LinearBn weights stored transposed: (in, out).
        "w1": scale * jax.random.normal(ks[0], (113, hidden), jnp.float32),
        "g1": 1.0 + 0.1 * jax.random.normal(ks[1], (1, hidden), jnp.float32),
        "b1": 0.1 * jax.random.normal(ks[2], (1, hidden), jnp.float32),
        "w2": scale * jax.random.normal(ks[3], (hidden, hidden), jnp.float32),
        "g2": 1.0 + 0.1 * jax.random.normal(ks[4], (1, hidden), jnp.float32),
        "b2": 0.1 * jax.random.normal(ks[5], (1, hidden), jnp.float32),
        "se_w1": scale * jax.random.normal(ks[6], (hc, hq), jnp.float32),
        "se_b1": 0.1 * jax.random.normal(ks[7], (1, hq), jnp.float32),
        "se_w2": scale * jax.random.normal(ks[8], (hq, hc), jnp.float32),
        "se_b2": 0.1 * jax.random.normal(ks[9], (1, hc), jnp.float32),
        "w3": scale * jax.random.normal(ks[10], (hc, hidden), jnp.float32),
        "g3": 1.0 + 0.1 * jax.random.normal(ks[11], (1, hidden), jnp.float32),
        "b3": jnp.zeros((1, hidden), jnp.float32),
    }


if __name__ == "__main__":
    key = jax.random.PRNGKey(0)
    k_x, k_p = jax.random.split(key)

    N = 8          # number of nodes (batch for BatchNorm1d)
    HIDDEN = 32    # hidden size of NodeEmbModule

    x = jax.random.normal(k_x, (N, 113), jnp.float32)
    params = make_params(k_p, HIDDEN)

    # f32 everywhere: faithful to the PyTorch module, tight tolerance.
    # (Recommended default on v5e, which has no bf16 VPU.)
    fwd = jax.jit(functools.partial(node_emb_forward, compute_dtype=jnp.float32))
    out = jax.block_until_ready(fwd(x, params))
    ref = jax.block_until_ready(node_emb_reference(x, params))
    assert out.shape == (N, HIDDEN)
    np.testing.assert_allclose(np.asarray(out), np.asarray(ref), rtol=1e-4, atol=1e-4)

    # bf16 MXU operands + bf16 inter-pass storage, f32 accumulation/statistics
    # (v6e/v7x fast path): loose sanity check.
    fwd_bf16 = jax.jit(functools.partial(node_emb_forward, compute_dtype=jnp.bfloat16))
    out_bf16 = jax.block_until_ready(fwd_bf16(x, params))
    np.testing.assert_allclose(np.asarray(out_bf16), np.asarray(ref), rtol=1e-1, atol=1e-1)

    print("KERNEL_OK")
</pallas_src>

<mosaic_0001>
module attributes {stable_mosaic.version = 11 : i64} {
  func.func @kernel(%arg0: i32, %arg1: memref<8x128xf32, #tpu.memory_space<vmem>>, %arg2: memref<128x128xf32, #tpu.memory_space<vmem>>, %arg3: memref<8x128xf32, #tpu.memory_space<vmem>>, %arg4: memref<1x2x128xf32, #tpu.memory_space<vmem>>) attributes {dimension_semantics = [#tpu.dimension_semantics<parallel>], iteration_bounds = array<i64: 1>, scalar_prefetch = 0 : i64, scratch_operands = 0 : i64, tpu.core_type = #tpu.core_type<tc>, window_params = [{transform_indices = @transform_0, window_bounds = array<i64: 8, 128>}, {pipeline_mode = #tpu.pipeline_mode<synchronous>, transform_indices = @transform_1, window_bounds = array<i64: 128, 128>}, {transform_indices = @transform_2, window_bounds = array<i64: 8, 128>}, {transform_indices = @transform_3, window_bounds = array<i64: 1, 2, 128>}]} {
    %c0 = arith.constant 0 : index
    %c0_0 = arith.constant 0 : index
    %0 = vector.load %arg2[%c0, %c0_0] : memref<128x128xf32, #tpu.memory_space<vmem>>, vector<128x128xf32>
    %c0_1 = arith.constant 0 : index
    %c0_2 = arith.constant 0 : index
    %1 = vector.load %arg1[%c0_1, %c0_2] : memref<8x128xf32, #tpu.memory_space<vmem>>, vector<8x128xf32>
    %cst = arith.constant dense<0.000000e+00> : vector<8x128xf32>
    %2 = tpu.matmul %1, %0, %cst {dimension_numbers = #tpu.dot_dimension_numbers<[1], [0], [0], [1], [0, 0, 1, 1], [], []>} : vector<8x128xf32>, vector<128x128xf32>, vector<8x128xf32> -> vector<8x128xf32>
    %c0_3 = arith.constant 0 : index
    %c0_4 = arith.constant 0 : index
    %3 = vector.load %arg3[%c0_3, %c0_4] : memref<8x128xf32, #tpu.memory_space<vmem>>, vector<8x128xf32>
    tpu.vector_store %arg3[%c0_3, %c0_4], %2 {strides = array<i32>} : memref<8x128xf32, #tpu.memory_space<vmem>>, vector<8x128xf32>,
    %cst_5 = arith.constant dense<0.000000e+00> : vector<128xf32>
    %4 = vector.multi_reduction <add>, %2, %cst_5 [0] : vector<8x128xf32> to vector<128xf32>
    %5 = vector.shape_cast %4 : vector<128xf32> to vector<1x128xf32>
    %6 = arith.mulf %2, %2 : vector<8x128xf32>
    %cst_6 = arith.constant dense<0.000000e+00> : vector<128xf32>
    %7 = vector.multi_reduction <add>, %6, %cst_6 [0] : vector<8x128xf32> to vector<128xf32>
    %8 = vector.shape_cast %7 : vector<128xf32> to vector<1x128xf32>
    %9 = tpu.concatenate %5, %8 in 0 : vector<1x128xf32>, vector<1x128xf32> -> vector<2x128xf32>
    %10 = vector.shape_cast %9 : vector<2x128xf32> to vector<1x2x128xf32>
    %c0_7 = arith.constant 0 : index
    %c0_8 = arith.constant 0 : index
    %c0_9 = arith.constant 0 : index
    %11 = vector.load %arg4[%c0_7, %c0_8, %c0_9] : memref<1x2x128xf32, #tpu.memory_space<vmem>>, vector<1x2x128xf32>
    tpu.vector_store %arg4[%c0_7, %c0_8, %c0_9], %10 {strides = array<i32>} : memref<1x2x128xf32, #tpu.memory_space<vmem>>, vector<1x2x128xf32>,
    return
  }
  func.func @transform_0(%arg0: i32) -> (i32, i32) {
    %c0_i32 = arith.constant 0 : i32
    %c0_i32_0 = arith.constant 0 : i32
    return %arg0, %c0_i32 : i32, i32
  }
  func.func @transform_1(%arg0: i32) -> (i32, i32) {
    %c0_i32 = arith.constant 0 : i32
    %c0_i32_0 = arith.constant 0 : i32
    %c0_i32_1 = arith.constant 0 : i32
    return %c0_i32, %c0_i32_0 : i32, i32
  }
  func.func @transform_2(%arg0: i32) -> (i32, i32) {
    %c0_i32 = arith.constant 0 : i32
    %c0_i32_0 = arith.constant 0 : i32
    return %arg0, %c0_i32 : i32, i32
  }
  func.func @transform_3(%arg0: i32) -> (i32, i32, i32) {
    %c0_i32 = arith.constant 0 : i32
    %c0_i32_0 = arith.constant 0 : i32
    %c0_i32_1 = arith.constant 0 : i32
    return %arg0, %c0_i32, %c0_i32_0 : i32, i32, i32
  }
}

module attributes {stable_mosaic.version = 11 : i64} {
  func.func @kernel(%arg0: i32, %arg1: memref<8x128xf32, #tpu.memory_space<vmem>>, %arg2: memref<1x128xf32, #tpu.memory_space<vmem>>, %arg3: memref<1x128xf32, #tpu.memory_space<vmem>>, %arg4: memref<128x128xf32, #tpu.memory_space<vmem>>, %arg5: memref<8x128xf32, #tpu.memory_space<vmem>>, %arg6: memref<1x2x128xf32, #tpu.memory_space<vmem>>) attributes {dimension_semantics = [#tpu.dimension_semantics<parallel>], iteration_bounds = array<i64: 1>, scalar_prefetch = 0 : i64, scratch_operands = 0 : i64, tpu.core_type = #tpu.core_type<tc>, window_params = [{transform_indices = @transform_0, window_bounds = array<i64: 8, 128>}, {pipeline_mode = #tpu.pipeline_mode<synchronous>, transform_indices = @transform_1, window_bounds = array<i64: 1, 128>}, {pipeline_mode = #tpu.pipeline_mode<synchronous>, transform_indices = @transform_2, window_bounds = array<i64: 1, 128>}, {pipeline_mode = #tpu.pipeline_mode<synchronous>, transform_indices = @transform_3, window_bounds = array<i64: 128, 128>}, {transform_indices = @transform_4, window_bounds = array<i64: 8, 128>}, {transform_indices = @transform_5, window_bounds = array<i64: 1, 2, 128>}]} {
    %c0 = arith.constant 0 : index
    %c0_0 = arith.constant 0 : index
    %0 = vector.load %arg1[%c0, %c0_0] : memref<8x128xf32, #tpu.memory_space<vmem>>, vector<8x128xf32>
    %c0_1 = arith.constant 0 : index
    %c0_2 = arith.constant 0 : index
    %1 = vector.load %arg2[%c0_1, %c0_2] : memref<1x128xf32, #tpu.memory_space<vmem>>, vector<1x128xf32>
    %2 = vector.broadcast %1 : vector<1x128xf32> to vector<8x128xf32>
    %3 = arith.mulf %0, %2 : vector<8x128xf32>
    %c0_3 = arith.constant 0 : index
    %c0_4 = arith.constant 0 : index
    %4 = vector.load %arg3[%c0_3, %c0_4] : memref<1x128xf32, #tpu.memory_space<vmem>>, vector<1x128xf32>
    %5 = vector.broadcast %4 : vector<1x128xf32> to vector<8x128xf32>
    %6 = arith.addf %3, %5 : vector<8x128xf32>
    %cst = arith.constant 0.000000e+00 : f32
    %7 = vector.broadcast %cst : f32 to vector<8x128xf32>
    %8 = arith.maximumf %6, %7 : vector<8x128xf32>
    %c0_5 = arith.constant 0 : index
    %c0_6 = arith.constant 0 : index
    %9 = vector.load %arg4[%c0_5, %c0_6] : memref<128x128xf32, #tpu.memory_space<vmem>>, vector<128x128xf32>
    %cst_7 = arith.constant dense<0.000000e+00> : vector<8x128xf32>
    %10 = tpu.matmul %8, %9, %cst_7 {dimension_numbers = #tpu.dot_dimension_numbers<[1], [0], [0], [1], [0, 0, 1, 1], [], []>} : vector<8x128xf32>, vector<128x128xf32>, vector<8x128xf32> -> vector<8x128xf32>
    %c0_8 = arith.constant 0 : index
    %c0_9 = arith.constant 0 : index
    %11 = vector.load %arg5[%c0_8, %c0_9] : memref<8x128xf32, #tpu.memory_space<vmem>>, vector<8x128xf32>
    tpu.vector_store %arg5[%c0_8, %c0_9], %10 {strides = array<i32>} : memref<8x128xf32, #tpu.memory_space<vmem>>, vector<8x128xf32>,
    %c8_i32 = arith.constant 8 : i32
    %12 = arith.muli %arg0, %c8_i32 : i32
    %13 = tpu.iota {dimensions = array<i32: 0>} : vector<8x1xi32>
    %14 = vector.broadcast %12 : i32 to vector<8x1xi32>
    %15 = arith.addi %14, %13 : vector<8x1xi32>
    %c8_i32_10 = arith.constant 8 : i32
    %16 = vector.broadcast %c8_i32_10 : i32 to vector<8x1xi32>
    %17 = arith.cmpi slt, %15, %16 : vector<8x1xi32>
    %cst_11 = arith.constant 0.000000e+00 : f32
    %18 = vector.shape_cast %17 : vector<8x1xi1> to vector<8x1xi1>
    %19 = vector.broadcast %18 : vector<8x1xi1> to vector<8x128xi1>
    %20 = vector.broadcast %cst_11 : f32 to vector<8x128xf32>
    %21 = arith.select %19, %10, %20 : vector<8x128xi1>, vector<8x128xf32>
    %cst_12 = arith.constant dense<0.000000e+00> : vector<128xf32>
    %22 = vector.multi_reduction <add>, %21, %cst_12 [0] : vector<8x128xf32> to vector<128xf32>
    %23 = vector.shape_cast %22 : vector<128xf32> to vector<1x128xf32>
    %24 = arith.mulf %21, %21 : vector<8x128xf32>
    %cst_13 = arith.constant dense<0.000000e+00> : vector<128xf32>
    %25 = vector.multi_reduction <add>, %24, %cst_13 [0] : vector<8x128xf32> to vector<128xf32>
    %26 = vector.shape_cast %25 : vector<128xf32> to vector<1x128xf32>
    %27 = tpu.concatenate %23, %26 in 0 : vector<1x128xf32>, vector<1x128xf32> -> vector<2x128xf32>
    %28 = vector.shape_cast %27 : vector<2x128xf32> to vector<1x2x128xf32>
    %c0_14 = arith.constant 0 : index
    %c0_15 = arith.constant 0 : index
    %c0_16 = arith.constant 0 : index
    %29 = vector.load %arg6[%c0_14, %c0_15, %c0_16] : memref<1x2x128xf32, #tpu.memory_space<vmem>>, vector<1x2x128xf32>
    tpu.vector_store %arg6[%c0_14, %c0_15, %c0_16], %28 {strides = array<i32>} : memref<1x2x128xf32, #tpu.memory_space<vmem>>, vector<1x2x128xf32>,
    return
  }
  func.func @transform_0(%arg0: i32) -> (i32, i32) {
    %c0_i32 = arith.constant 0 : i32
    %c0_i32_0 = arith.constant 0 : i32
    return %arg0, %c0_i32 : i32, i32
  }
  func.func @transform_1(%arg0: i32) -> (i32, i32) {
    %c0_i32 = arith.constant 0 : i32
    %c0_i32_0 = arith.constant 0 : i32
    %c0_i32_1 = arith.constant 0 : i32
    return %c0_i32, %c0_i32_0 : i32, i32
  }
  func.func @transform_2(%arg0: i32) -> (i32, i32) {
    %c0_i32 = arith.constant 0 : i32
    %c0_i32_0 = arith.constant 0 : i32
    %c0_i32_1 = arith.constant 0 : i32
    return %c0_i32, %c0_i32_0 : i32, i32
  }
  func.func @transform_3(%arg0: i32) -> (i32, i32) {
    %c0_i32 = arith.constant 0 : i32
    %c0_i32_0 = arith.constant 0 : i32
    %c0_i32_1 = arith.constant 0 : i32
    return %c0_i32, %c0_i32_0 : i32, i32
  }
  func.func @transform_4(%arg0: i32) -> (i32, i32) {
    %c0_i32 = arith.constant 0 : i32
    %c0_i32_0 = arith.constant 0 : i32
    return %arg0, %c0_i32 : i32, i32
  }
  func.func @transform_5(%arg0: i32) -> (i32, i32, i32) {
    %c0_i32 = arith.constant 0 : i32
    %c0_i32_0 = arith.constant 0 : i32
    %c0_i32_1 = arith.constant 0 : i32
    return %arg0, %c0_i32, %c0_i32_0 : i32, i32, i32
  }
}

module attributes {stable_mosaic.version = 11 : i64} {
  func.func @bn_relu_kernel(%arg0: i32, %arg1: memref<8x128xf32, #tpu.memory_space<vmem>>, %arg2: memref<1x128xf32, #tpu.memory_space<vmem>>, %arg3: memref<1x128xf32, #tpu.memory_space<vmem>>, %arg4: memref<8x128xf32, #tpu.memory_space<vmem>>) attributes {dimension_semantics = [#tpu.dimension_semantics<parallel>], iteration_bounds = array<i64: 1>, scalar_prefetch = 0 : i64, scratch_operands = 0 : i64, tpu.core_type = #tpu.core_type<tc>, window_params = [{transform_indices = @transform_0, window_bounds = array<i64: 8, 128>}, {pipeline_mode = #tpu.pipeline_mode<synchronous>, transform_indices = @transform_1, window_bounds = array<i64: 1, 128>}, {pipeline_mode = #tpu.pipeline_mode<synchronous>, transform_indices = @transform_2, window_bounds = array<i64: 1, 128>}, {transform_indices = @transform_3, window_bounds = array<i64: 8, 128>}]} {
    %c0 = arith.constant 0 : index
    %c0_0 = arith.constant 0 : index
    %0 = vector.load %arg1[%c0, %c0_0] : memref<8x128xf32, #tpu.memory_space<vmem>>, vector<8x128xf32>
    %c0_1 = arith.constant 0 : index
    %c0_2 = arith.constant 0 : index
    %1 = vector.load %arg2[%c0_1, %c0_2] : memref<1x128xf32, #tpu.memory_space<vmem>>, vector<1x128xf32>
    %2 = vector.broadcast %1 : vector<1x128xf32> to vector<8x128xf32>
    %3 = arith.mulf %0, %2 : vector<8x128xf32>
    %c0_3 = arith.constant 0 : index
    %c0_4 = arith.constant 0 : index
    %4 = vector.load %arg3[%c0_3, %c0_4] : memref<1x128xf32, #tpu.memory_space<vmem>>, vector<1x128xf32>
    %5 = vector.broadcast %4 : vector<1x128xf32> to vector<8x128xf32>
    %6 = arith.addf %3, %5 : vector<8x128xf32>
    %cst = arith.constant 0.000000e+00 : f32
    %7 = vector.broadcast %cst : f32 to vector<8x128xf32>
    %8 = arith.maximumf %6, %7 : vector<8x128xf32>
    %c0_5 = arith.constant 0 : index
    %c0_6 = arith.constant 0 : index
    %9 = vector.load %arg4[%c0_5, %c0_6] : memref<8x128xf32, #tpu.memory_space<vmem>>, vector<8x128xf32>
    tpu.vector_store %arg4[%c0_5, %c0_6], %8 {strides = array<i32>} : memref<8x128xf32, #tpu.memory_space<vmem>>, vector<8x128xf32>,
    return
  }
  func.func @transform_0(%arg0: i32) -> (i32, i32) {
    %c0_i32 = arith.constant 0 : i32
    %c0_i32_0 = arith.constant 0 : i32
    return %arg0, %c0_i32 : i32, i32
  }
  func.func @transform_1(%arg0: i32) -> (i32, i32) {
    %c0_i32 = arith.constant 0 : i32
    %c0_i32_0 = arith.constant 0 : i32
    %c0_i32_1 = arith.constant 0 : i32
    return %c0_i32, %c0_i32_0 : i32, i32
  }
  func.func @transform_2(%arg0: i32) -> (i32, i32) {
    %c0_i32 = arith.constant 0 : i32
    %c0_i32_0 = arith.constant 0 : i32
    %c0_i32_1 = arith.constant 0 : i32
    return %c0_i32, %c0_i32_0 : i32, i32
  }
  func.func @transform_3(%arg0: i32) -> (i32, i32) {
    %c0_i32 = arith.constant 0 : i32
    %c0_i32_0 = arith.constant 0 : i32
    return %arg0, %c0_i32 : i32, i32
  }
}

module attributes {stable_mosaic.version = 11 : i64} {
  func.func @kernel(%arg0: i32, %arg1: memref<8x128xf32, #tpu.memory_space<vmem>>, %arg2: memref<1x128xf32, #tpu.memory_space<vmem>>, %arg3: memref<1x128xf32, #tpu.memory_space<vmem>>, %arg4: memref<8x128xf32, #tpu.memory_space<vmem>>, %arg5: memref<1x128xf32, #tpu.memory_space<vmem>>, %arg6: memref<1x128xf32, #tpu.memory_space<vmem>>, %arg7: memref<128x128xf32, #tpu.memory_space<vmem>>, %arg8: memref<128x128xf32, #tpu.memory_space<vmem>>, %arg9: memref<1x128xf32, #tpu.memory_space<vmem>>, %arg10: memref<128x128xf32, #tpu.memory_space<vmem>>, %arg11: memref<128x128xf32, #tpu.memory_space<vmem>>, %arg12: memref<1x128xf32, #tpu.memory_space<vmem>>, %arg13: memref<1x128xf32, #tpu.memory_space<vmem>>, %arg14: memref<128x128xf32, #tpu.memory_space<vmem>>, %arg15: memref<128x128xf32, #tpu.memory_space<vmem>>, %arg16: memref<8x128xf32, #tpu.memory_space<vmem>>, %arg17: memref<1x2x128xf32, #tpu.memory_space<vmem>>) attributes {dimension_semantics = [#tpu.dimension_semantics<parallel>], iteration_bounds = array<i64: 1>, scalar_prefetch = 0 : i64, scratch_operands = 0 : i64, tpu.core_type = #tpu.core_type<tc>, window_params = [{transform_indices = @transform_0, window_bounds = array<i64: 8, 128>}, {pipeline_mode = #tpu.pipeline_mode<synchronous>, transform_indices = @transform_1, window_bounds = array<i64: 1, 128>}, {pipeline_mode = #tpu.pipeline_mode<synchronous>, transform_indices = @transform_2, window_bounds = array<i64: 1, 128>}, {transform_indices = @transform_3, window_bounds = array<i64: 8, 128>}, {pipeline_mode = #tpu.pipeline_mode<synchronous>, transform_indices = @transform_4, window_bounds = array<i64: 1, 128>}, {pipeline_mode = #tpu.pipeline_mode<synchronous>, transform_indices = @transform_5, window_bounds = array<i64: 1, 128>}, {pipeline_mode = #tpu.pipeline_mode<synchronous>, transform_indices = @transform_6, window_bounds = array<i64: 128, 128>}, {pipeline_mode = #tpu.pipeline_mode<synchronous>, transform_indices = @transform_7, window_bounds = array<i64: 128, 128>}, {pipeline_mode = #tpu.pipeline_mode<synchronous>, transform_indices = @transform_8, window_bounds = array<i64: 1, 128>}, {pipeline_mode = #tpu.pipeline_mode<synchronous>, transform_indices = @transform_9, window_bounds = array<i64: 128, 128>}, {pipeline_mode = #tpu.pipeline_mode<synchronous>, transform_indices = @transform_10, window_bounds = array<i64: 128, 128>}, {pipeline_mode = #tpu.pipeline_mode<synchronous>, transform_indices = @transform_11, window_bounds = array<i64: 1, 128>}, {pipeline_mode = #tpu.pipeline_mode<synchronous>, transform_indices = @transform_12, window_bounds = array<i64: 1, 128>}, {pipeline_mode = #tpu.pipeline_mode<synchronous>, transform_indices = @transform_13, window_bounds = array<i64: 128, 128>}, {pipeline_mode = #tpu.pipeline_mode<synchronous>, transform_indices = @transform_14, window_bounds = array<i64: 128, 128>}, {transform_indices = @transform_15, window_bounds = array<i64: 8, 128>}, {transform_indices = @transform_16, window_bounds = array<i64: 1, 2, 128>}]} {
    %c0 = arith.constant 0 : index
    %c0_0 = arith.constant 0 : index
    %0 = vector.load %arg1[%c0, %c0_0] : memref<8x128xf32, #tpu.memory_space<vmem>>, vector<8x128xf32>
    %c0_1 = arith.constant 0 : index
    %c0_2 = arith.constant 0 : index
    %1 = vector.load %arg2[%c0_1, %c0_2] : memref<1x128xf32, #tpu.memory_space<vmem>>, vector<1x128xf32>
    %2 = vector.broadcast %1 : vector<1x128xf32> to vector<8x128xf32>
    %3 = arith.mulf %0, %2 : vector<8x128xf32>
    %c0_3 = arith.constant 0 : index
    %c0_4 = arith.constant 0 : index
    %4 = vector.load %arg3[%c0_3, %c0_4] : memref<1x128xf32, #tpu.memory_space<vmem>>, vector<1x128xf32>
    %5 = vector.broadcast %4 : vector<1x128xf32> to vector<8x128xf32>
    %6 = arith.addf %3, %5 : vector<8x128xf32>
    %cst = arith.constant 0.000000e+00 : f32
    %7 = vector.broadcast %cst : f32 to vector<8x128xf32>
    %8 = arith.maximumf %6, %7 : vector<8x128xf32>
    %c0_5 = arith.constant 0 : index
    %c0_6 = arith.constant 0 : index
    %9 = vector.load %arg4[%c0_5, %c0_6] : memref<8x128xf32, #tpu.memory_space<vmem>>, vector<8x128xf32>
    %c0_7 = arith.constant 0 : index
    %c0_8 = arith.constant 0 : index
    %10 = vector.load %arg5[%c0_7, %c0_8] : memref<1x128xf32, #tpu.memory_space<vmem>>, vector<1x128xf32>
    %11 = vector.broadcast %10 : vector<1x128xf32> to vector<8x128xf32>
    %12 = arith.mulf %9, %11 : vector<8x128xf32>
    %c0_9 = arith.constant 0 : index
    %c0_10 = arith.constant 0 : index
    %13 = vector.load %arg6[%c0_9, %c0_10] : memref<1x128xf32, #tpu.memory_space<vmem>>, vector<1x128xf32>
    %14 = vector.broadcast %13 : vector<1x128xf32> to vector<8x128xf32>
    %15 = arith.addf %12, %14 : vector<8x128xf32>
    %cst_11 = arith.constant 0.000000e+00 : f32
    %16 = vector.broadcast %cst_11 : f32 to vector<8x128xf32>
    %17 = arith.maximumf %15, %16 : vector<8x128xf32>
    %c0_12 = arith.constant 0 : index
    %c0_13 = arith.constant 0 : index
    %18 = vector.load %arg7[%c0_12, %c0_13] : memref<128x128xf32, #tpu.memory_space<vmem>>, vector<128x128xf32>
    %cst_14 = arith.constant dense<0.000000e+00> : vector<8x128xf32>
    %19 = tpu.matmul %8, %18, %cst_14 {dimension_numbers = #tpu.dot_dimension_numbers<[1], [0], [0], [1], [0, 0, 1, 1], [], []>} : vector<8x128xf32>, vector<128x128xf32>, vector<8x128xf32> -> vector<8x128xf32>
    %c0_15 = arith.constant 0 : index
    %c0_16 = arith.constant 0 : index
    %20 = vector.load %arg8[%c0_15, %c0_16] : memref<128x128xf32, #tpu.memory_space<vmem>>, vector<128x128xf32>
    %cst_17 = arith.constant dense<0.000000e+00> : vector<8x128xf32>
    %21 = tpu.matmul %17, %20, %cst_17 {dimension_numbers = #tpu.dot_dimension_numbers<[1], [0], [0], [1], [0, 0, 1, 1], [], []>} : vector<8x128xf32>, vector<128x128xf32>, vector<8x128xf32> -> vector<8x128xf32>
    %22 = arith.addf %19, %21 : vector<8x128xf32>
    %c0_18 = arith.constant 0 : index
    %c0_19 = arith.constant 0 : index
    %23 = vector.load %arg9[%c0_18, %c0_19] : memref<1x128xf32, #tpu.memory_space<vmem>>, vector<1x128xf32>
    %24 = vector.broadcast %23 : vector<1x128xf32> to vector<8x128xf32>
    %25 = arith.addf %22, %24 : vector<8x128xf32>
    %cst_20 = arith.constant 0.000000e+00 : f32
    %26 = vector.broadcast %cst_20 : f32 to vector<8x128xf32>
    %27 = arith.maximumf %25, %26 : vector<8x128xf32>
    %c0_21 = arith.constant 0 : index
    %c0_22 = arith.constant 0 : index
    %28 = vector.load %arg10[%c0_21, %c0_22] : memref<128x128xf32, #tpu.memory_space<vmem>>, vector<128x128xf32>
    %cst_23 = arith.constant dense<0.000000e+00> : vector<8x128xf32>
    %29 = tpu.matmul %27, %28, %cst_23 {dimension_numbers = #tpu.dot_dimension_numbers<[1], [0], [0], [1], [0, 0, 1, 1], [], []>} : vector<8x128xf32>, vector<128x128xf32>, vector<8x128xf32> -> vector<8x128xf32>
    %c0_24 = arith.constant 0 : index
    %c0_25 = arith.constant 0 : index
    %30 = vector.load %arg12[%c0_24, %c0_25] : memref<1x128xf32, #tpu.memory_space<vmem>>, vector<1x128xf32>
    %31 = vector.broadcast %30 : vector<1x128xf32> to vector<8x128xf32>
    %32 = arith.addf %29, %31 : vector<8x128xf32>
    %33 = arith.negf %32 : vector<8x128xf32>
    %34 = math.exp %33 : vector<8x128xf32>
    %cst_26 = arith.constant 1.000000e+00 : f32
    %35 = vector.broadcast %cst_26 : f32 to vector<8x128xf32>
    %36 = arith.addf %35, %34 : vector<8x128xf32>
    %37 = arith.divf %35, %36 : vector<8x128xf32>
    %c0_27 = arith.constant 0 : index
    %c0_28 = arith.constant 0 : index
    %38 = vector.load %arg11[%c0_27, %c0_28] : memref<128x128xf32, #tpu.memory_space<vmem>>, vector<128x128xf32>
    %cst_29 = arith.constant dense<0.000000e+00> : vector<8x128xf32>
    %39 = tpu.matmul %27, %38, %cst_29 {dimension_numbers = #tpu.dot_dimension_numbers<[1], [0], [0], [1], [0, 0, 1, 1], [], []>} : vector<8x128xf32>, vector<128x128xf32>, vector<8x128xf32> -> vector<8x128xf32>
    %c0_30 = arith.constant 0 : index
    %c0_31 = arith.constant 0 : index
    %40 = vector.load %arg13[%c0_30, %c0_31] : memref<1x128xf32, #tpu.memory_space<vmem>>, vector<1x128xf32>
    %41 = vector.broadcast %40 : vector<1x128xf32> to vector<8x128xf32>
    %42 = arith.addf %39, %41 : vector<8x128xf32>
    %43 = arith.negf %42 : vector<8x128xf32>
    %44 = math.exp %43 : vector<8x128xf32>
    %cst_32 = arith.constant 1.000000e+00 : f32
    %45 = vector.broadcast %cst_32 : f32 to vector<8x128xf32>
    %46 = arith.addf %45, %44 : vector<8x128xf32>
    %47 = arith.divf %45, %46 : vector<8x128xf32>
    %48 = arith.mulf %37, %8 : vector<8x128xf32>
    %49 = arith.mulf %47, %17 : vector<8x128xf32>
    %c0_33 = arith.constant 0 : index
    %c0_34 = arith.constant 0 : index
    %50 = vector.load %arg14[%c0_33, %c0_34] : memref<128x128xf32, #tpu.memory_space<vmem>>, vector<128x128xf32>
    %cst_35 = arith.constant dense<0.000000e+00> : vector<8x128xf32>
    %51 = tpu.matmul %48, %50, %cst_35 {dimension_numbers = #tpu.dot_dimension_numbers<[1], [0], [0], [1], [0, 0, 1, 1], [], []>} : vector<8x128xf32>, vector<128x128xf32>, vector<8x128xf32> -> vector<8x128xf32>
    %c0_36 = arith.constant 0 : index
    %c0_37 = arith.constant 0 : index
    %52 = vector.load %arg15[%c0_36, %c0_37] : memref<128x128xf32, #tpu.memory_space<vmem>>, vector<128x128xf32>
    %cst_38 = arith.constant dense<0.000000e+00> : vector<8x128xf32>
    %53 = tpu.matmul %49, %52, %cst_38 {dimension_numbers = #tpu.dot_dimension_numbers<[1], [0], [0], [1], [0, 0, 1, 1], [], []>} : vector<8x128xf32>, vector<128x128xf32>, vector<8x128xf32> -> vector<8x128xf32>
    %54 = arith.addf %51, %53 : vector<8x128xf32>
    %c0_39 = arith.constant 0 : index
    %c0_40 = arith.constant 0 : index
    %55 = vector.load %arg16[%c0_39, %c0_40] : memref<8x128xf32, #tpu.memory_space<vmem>>, vector<8x128xf32>
    tpu.vector_store %arg16[%c0_39, %c0_40], %54 {strides = array<i32>} : memref<8x128xf32, #tpu.memory_space<vmem>>, vector<8x128xf32>,
    %c8_i32 = arith.constant 8 : i32
    %56 = arith.muli %arg0, %c8_i32 : i32
    %57 = tpu.iota {dimensions = array<i32: 0>} : vector<8x1xi32>
    %58 = vector.broadcast %56 : i32 to vector<8x1xi32>
    %59 = arith.addi %58, %57 : vector<8x1xi32>
    %c8_i32_41 = arith.constant 8 : i32
    %60 = vector.broadcast %c8_i32_41 : i32 to vector<8x1xi32>
    %61 = arith.cmpi slt, %59, %60 : vector<8x1xi32>
    %cst_42 = arith.constant 0.000000e+00 : f32
    %62 = vector.shape_cast %61 : vector<8x1xi1> to vector<8x1xi1>
    %63 = vector.broadcast %62 : vector<8x1xi1> to vector<8x128xi1>
    %64 = vector.broadcast %cst_42 : f32 to vector<8x128xf32>
    %65 = arith.select %63, %54, %64 : vector<8x128xi1>, vector<8x128xf32>
    %cst_43 = arith.constant dense<0.000000e+00> : vector<128xf32>
    %66 = vector.multi_reduction <add>, %65, %cst_43 [0] : vector<8x128xf32> to vector<128xf32>
    %67 = vector.shape_cast %66 : vector<128xf32> to vector<1x128xf32>
    %68 = arith.mulf %65, %65 : vector<8x128xf32>
    %cst_44 = arith.constant dense<0.000000e+00> : vector<128xf32>
    %69 = vector.multi_reduction <add>, %68, %cst_44 [0] : vector<8x128xf32> to vector<128xf32>
    %70 = vector.shape_cast %69 : vector<128xf32> to vector<1x128xf32>
    %71 = tpu.concatenate %67, %70 in 0 : vector<1x128xf32>, vector<1x128xf32> -> vector<2x128xf32>
    %72 = vector.shape_cast %71 : vector<2x128xf32> to vector<1x2x128xf32>
    %c0_45 = arith.constant 0 : index
    %c0_46 = arith.constant 0 : index
    %c0_47 = arith.constant 0 : index
    %73 = vector.load %arg17[%c0_45, %c0_46, %c0_47] : memref<1x2x128xf32, #tpu.memory_space<vmem>>, vector<1x2x128xf32>
    tpu.vector_store %arg17[%c0_45, %c0_46, %c0_47], %72 {strides = array<i32>} : memref<1x2x128xf32, #tpu.memory_space<vmem>>, vector<1x2x128xf32>,
    return
  }
  func.func @transform_0(%arg0: i32) -> (i32, i32) {
    %c0_i32 = arith.constant 0 : i32
    %c0_i32_0 = arith.constant 0 : i32
    return %arg0, %c0_i32 : i32, i32
  }
  func.func @transform_1(%arg0: i32) -> (i32, i32) {
    %c0_i32 = arith.constant 0 : i32
    %c0_i32_0 = arith.constant 0 : i32
    %c0_i32_1 = arith.constant 0 : i32
    return %c0_i32, %c0_i32_0 : i32, i32
  }
  func.func @transform_2(%arg0: i32) -> (i32, i32) {
    %c0_i32 = arith.constant 0 : i32
    %c0_i32_0 = arith.constant 0 : i32
    %c0_i32_1 = arith.constant 0 : i32
    return %c0_i32, %c0_i32_0 : i32, i32
  }
  func.func @transform_3(%arg0: i32) -> (i32, i32) {
    %c0_i32 = arith.constant 0 : i32
    %c0_i32_0 = arith.constant 0 : i32
    return %arg0, %c0_i32 : i32, i32
  }
  func.func @transform_4(%arg0: i32) -> (i32, i32) {
    %c0_i32 = arith.constant 0 : i32
    %c0_i32_0 = arith.constant 0 : i32
    %c0_i32_1 = arith.constant 0 : i32
    return %c0_i32, %c0_i32_0 : i32, i32
  }
  func.func @transform_5(%arg0: i32) -> (i32, i32) {
    %c0_i32 = arith.constant 0 : i32
    %c0_i32_0 = arith.constant 0 : i32
    %c0_i32_1 = arith.constant 0 : i32
    return %c0_i32, %c0_i32_0 : i32, i32
  }
  func.func @transform_6(%arg0: i32) -> (i32, i32) {
    %c0_i32 = arith.constant 0 : i32
    %c0_i32_0 = arith.constant 0 : i32
    %c0_i32_1 = arith.constant 0 : i32
    return %c0_i32, %c0_i32_0 : i32, i32
  }
  func.func @transform_7(%arg0: i32) -> (i32, i32) {
    %c0_i32 = arith.constant 0 : i32
    %c0_i32_0 = arith.constant 0 : i32
    %c0_i32_1 = arith.constant 0 : i32
    return %c0_i32, %c0_i32_0 : i32, i32
  }
  func.func @transform_8(%arg0: i32) -> (i32, i32) {
    %c0_i32 = arith.constant 0 : i32
    %c0_i32_0 = arith.constant 0 : i32
    %c0_i32_1 = arith.constant 0 : i32
    return %c0_i32, %c0_i32_0 : i32, i32
  }
  func.func @transform_9(%arg0: i32) -> (i32, i32) {
    %c0_i32 = arith.constant 0 : i32
    %c0_i32_0 = arith.constant 0 : i32
    %c0_i32_1 = arith.constant 0 : i32
    return %c0_i32, %c0_i32_0 : i32, i32
  }
  func.func @transform_10(%arg0: i32) -> (i32, i32) {
    %c0_i32 = arith.constant 0 : i32
    %c0_i32_0 = arith.constant 0 : i32
    %c0_i32_1 = arith.constant 0 : i32
    return %c0_i32, %c0_i32_0 : i32, i32
  }
  func.func @transform_11(%arg0: i32) -> (i32, i32) {
    %c0_i32 = arith.constant 0 : i32
    %c0_i32_0 = arith.constant 0 : i32
    %c0_i32_1 = arith.constant 0 : i32
    return %c0_i32, %c0_i32_0 : i32, i32
  }
  func.func @transform_12(%arg0: i32) -> (i32, i32) {
    %c0_i32 = arith.constant 0 : i32
    %c0_i32_0 = arith.constant 0 : i32
    %c0_i32_1 = arith.constant 0 : i32
    return %c0_i32, %c0_i32_0 : i32, i32
  }
  func.func @transform_13(%arg0: i32) -> (i32, i32) {
    %c0_i32 = arith.constant 0 : i32
    %c0_i32_0 = arith.constant 0 : i32
    %c0_i32_1 = arith.constant 0 : i32
    return %c0_i32, %c0_i32_0 : i32, i32
  }
  func.func @transform_14(%arg0: i32) -> (i32, i32) {
    %c0_i32 = arith.constant 0 : i32
    %c0_i32_0 = arith.constant 0 : i32
    %c0_i32_1 = arith.constant 0 : i32
    return %c0_i32, %c0_i32_0 : i32, i32
  }
  func.func @transform_15(%arg0: i32) -> (i32, i32) {
    %c0_i32 = arith.constant 0 : i32
    %c0_i32_0 = arith.constant 0 : i32
    return %arg0, %c0_i32 : i32, i32
  }
  func.func @transform_16(%arg0: i32) -> (i32, i32, i32) {
    %c0_i32 = arith.constant 0 : i32
    %c0_i32_0 = arith.constant 0 : i32
    %c0_i32_1 = arith.constant 0 : i32
    return %arg0, %c0_i32, %c0_i32_0 : i32, i32, i32
  }
}

</mosaic_0001>

<llo_original>
// kernel: node_emb_forward.4
$region0: #{node_emb_forward.4}
  #allocation0 [shape = 'u32[]', space=smem, size = 0x4, offset = 0x4, fixed_abs, tag = 'smem constant byte address 0x4 - core index']
  #allocation1 [shape = 'u32[144,128]{1,0:T(1,128)}', space=vmem, size = 0x12000, scoped, tag = 'internal scratch']
  %s0 = inlined_call_operand.vmem [shape: f32[8,128], index: 0, kind: input, shape index: {}]
  %s1 = inlined_call_operand.vmem [shape: f32[128,128], index: 1, kind: input, shape index: {}]
  %s2 = inlined_call_operand.vmem [shape: f32[8,128], index: 2, kind: output, shape index: {0}]
  %s3 = inlined_call_operand.vmem [shape: f32[1,2,128], index: 3, kind: output, shape index: {1}]
  %4 = xla_tuple %s2, %s3
  %s5 = sld [smem:[#allocation0]]
  $region26: #{node_emb_forward.4} parent=0
    _
  %s7 = ssub.s32 1, %s5
  %s8 = scalar_select 0, %s7, %s5
  // Predicated region
  $region2: #{node_emb_forward.4} parent=0 // pred_check
    _
  $region3: #{node_emb_forward.4} parent=0 // pred_check_branch
    %10 = sbr.rel (0) target = $region5
  $region4: #{node_emb_forward.4} parent=0 // pred_region
    _
  $region5: #{node_emb_forward.4} parent=0 // pred_fallthru
    _
  // Predicated region
  $region6: #{node_emb_forward.4} parent=0 // pred_check
    _
  $region7: #{node_emb_forward.4} parent=0 // pred_check_branch
    %12 = sbr.rel (0) target = $region9
  $region8: #{node_emb_forward.4} parent=0 // pred_region
    _
  $region9: #{node_emb_forward.4} parent=0 // pred_fallthru
    _
  %v13 = vld [vmem:[%s1] sm:$0xff]
  %v14 = vld [vmem:[%s1 + $0x8] sm:$0xff]
  %v15 = vld [vmem:[%s1 + $0x10] sm:$0xff]
  %v16 = vld [vmem:[%s1 + $0x18] sm:$0xff]
  %v17 = vld [vmem:[%s1 + $0x20] sm:$0xff]
  %v18 = vld [vmem:[%s1 + $0x28] sm:$0xff]
  %v19 = vld [vmem:[%s1 + $0x30] sm:$0xff]
  %v20 = vld [vmem:[%s1 + $0x38] sm:$0xff]
  %v21 = vld [vmem:[%s1 + $0x40] sm:$0xff]
  %v22 = vld [vmem:[%s1 + $0x48] sm:$0xff]
  %v23 = vld [vmem:[%s1 + $0x50] sm:$0xff]
  %v24 = vld [vmem:[%s1 + $0x58] sm:$0xff]
  %v25 = vld [vmem:[%s1 + $0x60] sm:$0xff]
  %v26 = vld [vmem:[%s1 + $0x68] sm:$0xff]
  %v27 = vld [vmem:[%s1 + $0x70] sm:$0xff]
  %v28 = vld [vmem:[%s1 + $0x78] sm:$0xff]
  %v29 = vld [vmem:[%s0] sm:$0xff]
  %30 = vmatprep.subr.mxu0 0.0
  %31 = vmatpush1.msra.mxu0 %v13
  %32 = vmatprep.subr.mxu0 0.0
  %33 = vmatpush1.msra.mxu0 %v14
  %34 = vmatprep.subr.mxu0 0.0
  %35 = vmatpush1.msra.mxu0 %v15
  %36 = vmatprep.subr.mxu0 0.0
  %37 = vmatpush1.msra.mxu0 %v16
  %38 = vmatprep.subr.mxu0 0.0
  %39 = vmatpush1.msra.mxu0 %v17
  %40 = vmatprep.subr.mxu0 0.0
  %41 = vmatpush1.msra.mxu0 %v18
  %42 = vmatprep.subr.mxu0 0.0
  %43 = vmatpush1.msra.mxu0 %v19
  %44 = vmatprep.subr.mxu0 0.0
  %45 = vmatpush1.msra.mxu0 %v20
  %46 = vmatprep.subr.mxu0 0.0
  %47 = vmatpush1.msra.mxu0 %v21
  %48 = vmatprep.subr.mxu0 0.0
  %49 = vmatpush1.msra.mxu0 %v22
  %50 = vmatprep.subr.mxu0 0.0
  %51 = vmatpush1.msra.mxu0 %v23
  %52 = vmatprep.subr.mxu0 0.0
  %53 = vmatpush1.msra.mxu0 %v24
  %54 = vmatprep.subr.mxu0 0.0
  %55 = vmatpush1.msra.mxu0 %v25
  %56 = vmatprep.subr.mxu0 0.0
  %57 = vmatpush1.msra.mxu0 %v26
  %58 = vmatprep.subr.mxu0 0.0
  %59 = vmatpush1.msra.mxu0 %v27
  %60 = vmatprep.subr.mxu0 0.0
  %61 = vmatpush1.msra.mxu0 %v28
  %62 = vmatprep.subr.mxu0 0.0
  %63 = vmatpush1.msra.mxu0 0.0
  %64 = vmatprep.subr.mxu0 0.0
  %65 = vmatpush1.msra.mxu0 0.0
  %66 = vmatprep.subr.mxu0 0.0
  %67 = vmatpush1.msra.mxu0 0.0
  %68 = vmatprep.subr.mxu0 0.0
  %69 = vmatpush1.msra.mxu0 0.0
  %70 = vmatprep.subr.mxu0 0.0
  %71 = vmatpush1.msra.mxu0 0.0
  %72 = vmatprep.subr.mxu0 0.0
  %73 = vmatpush1.msra.mxu0 0.0
  %74 = vmatprep.subr.mxu0 0.0
  %75 = vmatpush1.msra.mxu0 0.0
  %76 = vmatprep.subr.mxu0 0.0
  %77 = vmatpush1.msra.mxu0 0.0
  %78 = vmatprep.subr.mxu0 0.0
  %79 = vmatpush1.msra.mxu0 0.0
  %80 = vmatprep.subr.mxu0 0.0
  %81 = vmatpush1.msra.mxu0 0.0
  %82 = vmatprep.subr.mxu0 0.0
  %83 = vmatpush1.msra.mxu0 0.0
  %84 = vmatprep.subr.mxu0 0.0
  %85 = vmatpush1.msra.mxu0 0.0
  %86 = vmatprep.subr.mxu0 0.0
  %87 = vmatpush1.msra.mxu0 0.0
  %88 = vmatprep.subr.mxu0 0.0
  %89 = vmatpush1.msra.mxu0 0.0
  %90 = vmatprep.subr.mxu0 0.0
  %91 = vmatpush1.msra.mxu0 0.0
  %92 = vmatprep.subr.mxu0 0.0
  %93 = vmatpush1.msra.mxu0 0.0
  %94 = vmatprep.mubr.f32.mxu0 0.0
  %95 = vmatmul.mubr.f32.gmra.mrb[0].mxu0 %v29
  %v96 = vpop.f32.mrb[0].mxu0
  %v97 = vadd.f32 0.0, %v96
  %v98 = vpop.f32.mrb[0].mxu0
  %99 = vdwg.mxu0
  %100 = vst [vmem:[%s2] sm:$0xff] %v97
  %v101 = vrot.slane %v97, 4
  %v102 = vadd.f32 %v97, %v101
  %v103 = vrot.slane %v102, 2
  %v104 = vadd.f32 %v102, %v103
  %v105 = vrot.slane %v104, 1
  %v106 = vadd.f32 %v104, %v105
  %v107 = vmul.f32 %v97, %v97
  %v108 = vrot.slane %v107, 4
  %v109 = vadd.f32 %v107, %v108
  %v110 = vrot.slane %v109, 2
  %v111 = vadd.f32 %v109, %v110
  %v112 = vrot.slane %v111, 1
  %v113 = vadd.f32 %v111, %v112
  %vm114 = vcmask 1040384
  %v115 = vsel %vm114, %v106, %v113
  %116 = vst [vmem:[%s3] sm:$0x3] %v115
  // Predicated region
  $region10: #{node_emb_forward.4} parent=0 // pred_check
    _
  $region11: #{node_emb_forward.4} parent=0 // pred_check_branch
    %118 = sbr.rel (0) target = $region13
  $region12: #{node_emb_forward.4} parent=0 // pred_region
    _
  $region13: #{node_emb_forward.4} parent=0 // pred_fallthru
    _
  // Predicated region
  $region14: #{node_emb_forward.4} parent=0 // pred_check
    _
  $region15: #{node_emb_forward.4} parent=0 // pred_check_branch
    %120 = sbr.rel (0) target = $region17
  $region16: #{node_emb_forward.4} parent=0 // pred_region
    _
  $region17: #{node_emb_forward.4} parent=0 // pred_fallthru
    _
  // Predicated region
  $region18: #{node_emb_forward.4} parent=0 // pred_check
    _
  $region19: #{node_emb_forward.4} parent=0 // pred_check_branch
    %122 = sbr.rel (0) target = $region21
  $region20: #{node_emb_forward.4} parent=0 // pred_region
    _
  $region21: #{node_emb_forward.4} parent=0 // pred_fallthru
    _
  // Predicated region
  $region22: #{node_emb_forward.4} parent=0 // pred_check
    _
  $region23: #{node_emb_forward.4} parent=0 // pred_check_branch
    %124 = sbr.rel (0) target = $region25
  $region24: #{node_emb_forward.4} parent=0 // pred_region
    _
  $region25: #{node_emb_forward.4} parent=0 // pred_fallthru
    _

// kernel: node_emb_forward.5
$region0: #{node_emb_forward.5}
  #allocation0 [shape = 'u32[]', space=smem, size = 0x4, offset = 0x4, fixed_abs, tag = 'smem constant byte address 0x4 - core index']
  #allocation1 [shape = 'u32[144,128]{1,0:T(1,128)}', space=vmem, size = 0x12000, scoped, tag = 'internal scratch']
  %s0 = inlined_call_operand.vmem [shape: f32[8,128], index: 0, kind: input, shape index: {}]
  %s1 = inlined_call_operand.vmem [shape: f32[1,128], index: 1, kind: input, shape index: {}]
  %s2 = inlined_call_operand.vmem [shape: f32[1,128], index: 2, kind: input, shape index: {}]
  %s3 = inlined_call_operand.vmem [shape: f32[128,128], index: 3, kind: input, shape index: {}]
  %s4 = inlined_call_operand.vmem [shape: f32[8,128], index: 4, kind: output, shape index: {0}]
  %s5 = inlined_call_operand.vmem [shape: f32[1,2,128], index: 5, kind: output, shape index: {1}]
  %6 = xla_tuple %s4, %s5
  %s7 = sld [smem:[#allocation0]]
  $region34: #{node_emb_forward.5} parent=0
    _
  %s9 = ssub.s32 1, %s7
  %s10 = scalar_select 0, %s9, %s7
  // Predicated region
  $region2: #{node_emb_forward.5} parent=0 // pred_check
    _
  $region3: #{node_emb_forward.5} parent=0 // pred_check_branch
    %12 = sbr.rel (0) target = $region5
  $region4: #{node_emb_forward.5} parent=0 // pred_region
    _
  $region5: #{node_emb_forward.5} parent=0 // pred_fallthru
    _
  // Predicated region
  $region6: #{node_emb_forward.5} parent=0 // pred_check
    _
  $region7: #{node_emb_forward.5} parent=0 // pred_check_branch
    %14 = sbr.rel (0) target = $region9
  $region8: #{node_emb_forward.5} parent=0 // pred_region
    _
  $region9: #{node_emb_forward.5} parent=0 // pred_fallthru
    _
  // Predicated region
  $region10: #{node_emb_forward.5} parent=0 // pred_check
    _
  $region11: #{node_emb_forward.5} parent=0 // pred_check_branch
    %16 = sbr.rel (0) target = $region13
  $region12: #{node_emb_forward.5} parent=0 // pred_region
    _
  $region13: #{node_emb_forward.5} parent=0 // pred_fallthru
    _
  // Predicated region
  $region14: #{node_emb_forward.5} parent=0 // pred_check
    _
  $region15: #{node_emb_forward.5} parent=0 // pred_check_branch
    %18 = sbr.rel (0) target = $region17
  $region16: #{node_emb_forward.5} parent=0 // pred_region
    _
  $region17: #{node_emb_forward.5} parent=0 // pred_fallthru
    _
  %v19 = vld [vmem:[%s0] sm:$0xff]
  %v20 = vld [vmem:[%s1] sm:$0x1]
  %v22 = vlaneseq
  %v23 = vshrl.u32 %v22, 7
  %v24 = vsub.s32 0, %v23
  %v25 = vrot.slane %v20, %v24
  %v27 = vmul.f32 %v19, %v25
  %v28 = vld [vmem:[%s2] sm:$0x1]
  %v30 = vlaneseq
  %v31 = vshrl.u32 %v30, 7
  %v32 = vsub.s32 0, %v31
  %v33 = vrot.slane %v28, %v32
  %v35 = vadd.f32 %v27, %v33
  %v36 = vmax.f32 %v35, 0.0
  %v37 = vld [vmem:[%s3] sm:$0xff]
  %v38 = vld [vmem:[%s3 + $0x8] sm:$0xff]
  %v39 = vld [vmem:[%s3 + $0x10] sm:$0xff]
  %v40 = vld [vmem:[%s3 + $0x18] sm:$0xff]
  %v41 = vld [vmem:[%s3 + $0x20] sm:$0xff]
  %v42 = vld [vmem:[%s3 + $0x28] sm:$0xff]
  %v43 = vld [vmem:[%s3 + $0x30] sm:$0xff]
  %v44 = vld [vmem:[%s3 + $0x38] sm:$0xff]
  %v45 = vld [vmem:[%s3 + $0x40] sm:$0xff]
  %v46 = vld [vmem:[%s3 + $0x48] sm:$0xff]
  %v47 = vld [vmem:[%s3 + $0x50] sm:$0xff]
  %v48 = vld [vmem:[%s3 + $0x58] sm:$0xff]
  %v49 = vld [vmem:[%s3 + $0x60] sm:$0xff]
  %v50 = vld [vmem:[%s3 + $0x68] sm:$0xff]
  %v51 = vld [vmem:[%s3 + $0x70] sm:$0xff]
  %v52 = vld [vmem:[%s3 + $0x78] sm:$0xff]
  %53 = vmatprep.subr.mxu0 0.0
  %54 = vmatpush1.msra.mxu0 %v37
  %55 = vmatprep.subr.mxu0 0.0
  %56 = vmatpush1.msra.mxu0 %v38
  %57 = vmatprep.subr.mxu0 0.0
  %58 = vmatpush1.msra.mxu0 %v39
  %59 = vmatprep.subr.mxu0 0.0
  %60 = vmatpush1.msra.mxu0 %v40
  %61 = vmatprep.subr.mxu0 0.0
  %62 = vmatpush1.msra.mxu0 %v41
  %63 = vmatprep.subr.mxu0 0.0
  %64 = vmatpush1.msra.mxu0 %v42
  %65 = vmatprep.subr.mxu0 0.0
  %66 = vmatpush1.msra.mxu0 %v43
  %67 = vmatprep.subr.mxu0 0.0
  %68 = vmatpush1.msra.mxu0 %v44
  %69 = vmatprep.subr.mxu0 0.0
  %70 = vmatpush1.msra.mxu0 %v45
  %71 = vmatprep.subr.mxu0 0.0
  %72 = vmatpush1.msra.mxu0 %v46
  %73 = vmatprep.subr.mxu0 0.0
  %74 = vmatpush1.msra.mxu0 %v47
  %75 = vmatprep.subr.mxu0 0.0
  %76 = vmatpush1.msra.mxu0 %v48
  %77 = vmatprep.subr.mxu0 0.0
  %78 = vmatpush1.msra.mxu0 %v49
  %79 = vmatprep.subr.mxu0 0.0
  %80 = vmatpush1.msra.mxu0 %v50
  %81 = vmatprep.subr.mxu0 0.0
  %82 = vmatpush1.msra.mxu0 %v51
  %83 = vmatprep.subr.mxu0 0.0
  %84 = vmatpush1.msra.mxu0 %v52
  %85 = vmatprep.subr.mxu0 0.0
  %86 = vmatpush1.msra.mxu0 0.0
  %87 = vmatprep.subr.mxu0 0.0
  %88 = vmatpush1.msra.mxu0 0.0
  %89 = vmatprep.subr.mxu0 0.0
  %90 = vmatpush1.msra.mxu0 0.0
  %91 = vmatprep.subr.mxu0 0.0
  %92 = vmatpush1.msra.mxu0 0.0
  %93 = vmatprep.subr.mxu0 0.0
  %94 = vmatpush1.msra.mxu0 0.0
  %95 = vmatprep.subr.mxu0 0.0
  %96 = vmatpush1.msra.mxu0 0.0
  %97 = vmatprep.subr.mxu0 0.0
  %98 = vmatpush1.msra.mxu0 0.0
  %99 = vmatprep.subr.mxu0 0.0
  %100 = vmatpush1.msra.mxu0 0.0
  %101 = vmatprep.subr.mxu0 0.0
  %102 = vmatpush1.msra.mxu0 0.0
  %103 = vmatprep.subr.mxu0 0.0
  %104 = vmatpush1.msra.mxu0 0.0
  %105 = vmatprep.subr.mxu0 0.0
  %106 = vmatpush1.msra.mxu0 0.0
  %107 = vmatprep.subr.mxu0 0.0
  %108 = vmatpush1.msra.mxu0 0.0
  %109 = vmatprep.subr.mxu0 0.0
  %110 = vmatpush1.msra.mxu0 0.0
  %111 = vmatprep.subr.mxu0 0.0
  %112 = vmatpush1.msra.mxu0 0.0
  %113 = vmatprep.subr.mxu0 0.0
  %114 = vmatpush1.msra.mxu0 0.0
  %115 = vmatprep.subr.mxu0 0.0
  %116 = vmatpush1.msra.mxu0 0.0
  %117 = vmatprep.mubr.f32.mxu0 0.0
  %118 = vmatmul.mubr.f32.gmra.mrb[0].mxu0 %v36
  %v119 = vpop.f32.mrb[0].mxu0
  %v120 = vadd.f32 0.0, %v119
  %v121 = vpop.f32.mrb[0].mxu0
  %122 = vdwg.mxu0
  %123 = vst [vmem:[%s4] sm:$0xff] %v120
  %s124 = smul.u32 0, 8
  %v125 = vlaneseq
  %v126 = vshrl.u32 %v125, 7
  %v127 = vstv %s124
  %v128 = vadd.s32 %v127, %v126
  %vm129 = vcmp.lt.s32.totalorder %v128, 8
  %v130 = vsel %vm129, 1, 0
  %vm131 = vcmp.eq.s32.totalorder %v130, 1
  %v132 = vsel %vm131, %v120, 0.0
  %v133 = vrot.slane %v132, 4
  %v134 = vadd.f32 %v132, %v133
  %v135 = vrot.slane %v134, 2
  %v136 = vadd.f32 %v134, %v135
  %v137 = vrot.slane %v136, 1
  %v138 = vadd.f32 %v136, %v137
  %v139 = vmul.f32 %v132, %v132
  %v140 = vrot.slane %v139, 4
  %v141 = vadd.f32 %v139, %v140
  %v142 = vrot.slane %v141, 2
  %v143 = vadd.f32 %v141, %v142
  %v144 = vrot.slane %v143, 1
  %v145 = vadd.f32 %v143, %v144
  %vm146 = vcmask 1040384
  %v147 = vsel %vm146, %v138, %v145
  %148 = vst [vmem:[%s5] sm:$0x3] %v147
  // Predicated region
  $region18: #{node_emb_forward.5} parent=0 // pred_check
    _
  $region19: #{node_emb_forward.5} parent=0 // pred_check_branch
    %150 = sbr.rel (0) target = $region21
  $region20: #{node_emb_forward.5} parent=0 // pred_region
    _
  $region21: #{node_emb_forward.5} parent=0 // pred_fallthru
    _
  // Predicated region
  $region22: #{node_emb_forward.5} parent=0 // pred_check
    _
  $region23: #{node_emb_forward.5} parent=0 // pred_check_branch
    %152 = sbr.rel (0) target = $region25
  $region24: #{node_emb_forward.5} parent=0 // pred_region
    _
  $region25: #{node_emb_forward.5} parent=0 // pred_fallthru
    _
  // Predicated region
  $region26: #{node_emb_forward.5} parent=0 // pred_check
    _
  $region27: #{node_emb_forward.5} parent=0 // pred_check_branch
    %154 = sbr.rel (0) target = $region29
  $region28: #{node_emb_forward.5} parent=0 // pred_region
    _
  $region29: #{node_emb_forward.5} parent=0 // pred_fallthru
    _
  // Predicated region
  $region30: #{node_emb_forward.5} parent=0 // pred_check
    _
  $region31: #{node_emb_forward.5} parent=0 // pred_check_branch
    %156 = sbr.rel (0) target = $region33
  $region32: #{node_emb_forward.5} parent=0 // pred_region
    _
  $region33: #{node_emb_forward.5} parent=0 // pred_fallthru
    _

// kernel: node_emb_forward.7
$region0: #{node_emb_forward.7}
  #allocation0 [shape = 'u32[]', space=smem, size = 0x4, offset = 0x4, fixed_abs, tag = 'smem constant byte address 0x4 - core index']
  #allocation1 [shape = 'u32[144,128]{1,0:T(1,128)}', space=vmem, size = 0x12000, scoped, tag = 'internal scratch']
  %s0 = inlined_call_operand.vmem [shape: f32[8,128], index: 0, kind: input, shape index: {}]
  %s1 = inlined_call_operand.vmem [shape: f32[1,128], index: 1, kind: input, shape index: {}]
  %s2 = inlined_call_operand.vmem [shape: f32[1,128], index: 2, kind: input, shape index: {}]
  %s3 = inlined_call_operand.hbm [shape: f32[8,128], index: 3, kind: output, shape index: {}]
  %s4 = sld [smem:[#allocation0]]
  $region22: #{node_emb_forward.7} parent=0
    _
  %s6 = ssub.s32 1, %s4
  %s7 = scalar_select 0, %s6, %s4
  $region1: #{node_emb_forward.7} parent=0
    #allocation2 [shape = 'u8[4096]{0}', space=vmem, size = 0x1000, scoped, tag = 'output window, operand 0, single buffered']
    #allocation3 [shape = 's32[1]{0}', space=sflag, size = 0x4, scoped, tag = 'scoped memory for node_emb_forward.7']
    %8 = vsyncpa [#allocation3], 0
    // Predicated region
    $region2: #{node_emb_forward.7} parent=1 // pred_check
      _
    $region3: #{node_emb_forward.7} parent=1 // pred_check_branch
      %10 = sbr.rel (0) target = $region5
    $region4: #{node_emb_forward.7} parent=1 // pred_region
      _
    $region5: #{node_emb_forward.7} parent=1 // pred_fallthru
      _
    // Predicated region
    $region6: #{node_emb_forward.7} parent=1 // pred_check
      _
    $region7: #{node_emb_forward.7} parent=1 // pred_check_branch
      %12 = sbr.rel (0) target = $region9
    $region8: #{node_emb_forward.7} parent=1 // pred_region
      _
    $region9: #{node_emb_forward.7} parent=1 // pred_fallthru
      _
    // Predicated region
    $region10: #{node_emb_forward.7} parent=1 // pred_check
      _
    $region11: #{node_emb_forward.7} parent=1 // pred_check_branch
      %14 = sbr.rel (0) target = $region13
    $region12: #{node_emb_forward.7} parent=1 // pred_region
      _
    $region13: #{node_emb_forward.7} parent=1 // pred_fallthru
      _
    %v15 = vld [vmem:[%s0] sm:$0xff]
    %v16 = vld [vmem:[%s1] sm:$0x1]
    %v18 = vlaneseq
    %v19 = vshrl.u32 %v18, 7
    %v20 = vsub.s32 0, %v19
    %v21 = vrot.slane %v16, %v20
    %v23 = vmul.f32 %v15, %v21
    %v24 = vld [vmem:[%s2] sm:$0x1]
    %v26 = vlaneseq
    %v27 = vshrl.u32 %v26, 7
    %v28 = vsub.s32 0, %v27
    %v29 = vrot.slane %v24, %v28
    %v31 = vadd.f32 %v23, %v29
    %v32 = vmax.f32 %v31, 0.0
    %33 = vst [vmem:[#allocation2] sm:$0xff] %v32
    // Predicated region
    $region14: #{node_emb_forward.7} parent=1 // pred_check
      _
    $region15: #{node_emb_forward.7} parent=1 // pred_check_branch
      %35 = sbr.rel (0) target = $region17
    $region16: #{node_emb_forward.7} parent=1 // pred_region
      %s37 = ssub.s32 128, 128
      %38 = vsyncadd [#allocation3], %s37
      %s40 = sshll.u32 [#allocation2], 4
      %s41 = int_to_ptr.vmem [resolvable:$true] %s40
      %43 = dma.vmem_to_hbm [thread:$0]  %s41, 128, %s3, [#allocation3]
    $region17: #{node_emb_forward.7} parent=1 // pred_fallthru
      _
    // Predicated region
    $region18: #{node_emb_forward.7} parent=1 // pred_check
      _
    $region19: #{node_emb_forward.7} parent=1 // pred_check_branch
      %45 = sbr.rel (0) target = $region21
    $region20: #{node_emb_forward.7} parent=1 // pred_region
      %46 = dma.done [#allocation3], 128
    $region21: #{node_emb_forward.7} parent=1 // pred_fallthru
      _
    %47 = vsyncpa [#allocation3], 1

// kernel: node_emb_forward.6
$region0: #{node_emb_forward.6}
  #allocation0 [shape = 'u32[]', space=smem, size = 0x4, offset = 0x4, fixed_abs, tag = 'smem constant byte address 0x4 - core index']
  #allocation1 [shape = 'u32[144,128]{1,0:T(1,128)}', space=vmem, size = 0x12000, scoped, tag = 'internal scratch']
  %s0 = inlined_call_operand.vmem [shape: f32[8,128], index: 0, kind: input, shape index: {}]
  %s1 = inlined_call_operand.vmem [shape: f32[1,128], index: 1, kind: input, shape index: {}]
  %s2 = inlined_call_operand.vmem [shape: f32[1,128], index: 2, kind: input, shape index: {}]
  %s3 = inlined_call_operand.vmem [shape: f32[8,128], index: 3, kind: input, shape index: {}]
  %s4 = inlined_call_operand.vmem [shape: f32[1,128], index: 4, kind: input, shape index: {}]
  %s5 = inlined_call_operand.vmem [shape: f32[1,128], index: 5, kind: input, shape index: {}]
  %s6 = inlined_call_operand.vmem [shape: f32[128,128], index: 6, kind: input, shape index: {}]
  %s7 = inlined_call_operand.vmem [shape: f32[128,128], index: 7, kind: input, shape index: {}]
  %s8 = inlined_call_operand.vmem [shape: f32[1,128], index: 8, kind: input, shape index: {}]
  %s9 = inlined_call_operand.vmem [shape: f32[128,128], index: 9, kind: input, shape index: {}]
  %s10 = inlined_call_operand.vmem [shape: f32[128,128], index: 10, kind: input, shape index: {}]
  %s11 = inlined_call_operand.vmem [shape: f32[1,128], index: 11, kind: input, shape index: {}]
  %s12 = inlined_call_operand.vmem [shape: f32[1,128], index: 12, kind: input, shape index: {}]
  %s13 = inlined_call_operand.vmem [shape: f32[128,128], index: 13, kind: input, shape index: {}]
  %s14 = inlined_call_operand.vmem [shape: f32[128,128], index: 14, kind: input, shape index: {}]
  %s15 = inlined_call_operand.vmem [shape: f32[8,128], index: 15, kind: output, shape index: {0}]
  %s16 = inlined_call_operand.vmem [shape: f32[1,2,128], index: 16, kind: output, shape index: {1}]
  %17 = xla_tuple %s15, %s16
  %s18 = sld [smem:[#allocation0]]
  $region78: #{node_emb_forward.6} parent=0
    _
  %s20 = ssub.s32 1, %s18
  %s21 = scalar_select 0, %s20, %s18
  // Predicated region
  $region2: #{node_emb_forward.6} parent=0 // pred_check
    _
  $region3: #{node_emb_forward.6} parent=0 // pred_check_branch
    %23 = sbr.rel (0) target = $region5
  $region4: #{node_emb_forward.6} parent=0 // pred_region
    _
  $region5: #{node_emb_forward.6} parent=0 // pred_fallthru
    _
  // Predicated region
  $region6: #{node_emb_forward.6} parent=0 // pred_check
    _
  $region7: #{node_emb_forward.6} parent=0 // pred_check_branch
    %25 = sbr.rel (0) target = $region9
  $region8: #{node_emb_forward.6} parent=0 // pred_region
    _
  $region9: #{node_emb_forward.6} parent=0 // pred_fallthru
    _
  // Predicated region
  $region10: #{node_emb_forward.6} parent=0 // pred_check
    _
  $region11: #{node_emb_forward.6} parent=0 // pred_check_branch
    %27 = sbr.rel (0) target = $region13
  $region12: #{node_emb_forward.6} parent=0 // pred_region
    _
  $region13: #{node_emb_forward.6} parent=0 // pred_fallthru
    _
  // Predicated region
  $region14: #{node_emb_forward.6} parent=0 // pred_check
    _
  $region15: #{node_emb_forward.6} parent=0 // pred_check_branch
    %29 = sbr.rel (0) target = $region17
  $region16: #{node_emb_forward.6} parent=0 // pred_region
    _
  $region17: #{node_emb_forward.6} parent=0 // pred_fallthru
    _
  // Predicated region
  $region18: #{node_emb_forward.6} parent=0 // pred_check
    _
  $region19: #{node_emb_forward.6} parent=0 // pred_check_branch
    %31 = sbr.rel (0) target = $region21
  $region20: #{node_emb_forward.6} parent=0 // pred_region
    _
  $region21: #{node_emb_forward.6} parent=0 // pred_fallthru
    _
  // Predicated region
  $region22: #{node_emb_forward.6} parent=0 // pred_check
    _
  $region23: #{node_emb_forward.6} parent=0 // pred_check_branch
    %33 = sbr.rel (0) target = $region25
  $region24: #{node_emb_forward.6} parent=0 // pred_region
    _
  $region25: #{node_emb_forward.6} parent=0 // pred_fallthru
    _
  // Predicated region
  $region26: #{node_emb_forward.6} parent=0 // pred_check
    _
  $region27: #{node_emb_forward.6} parent=0 // pred_check_branch
    %35 = sbr.rel (0) target = $region29
  $region28: #{node_emb_forward.6} parent=0 // pred_region
    _
  $region29: #{node_emb_forward.6} parent=0 // pred_fallthru
    _
  // Predicated region
  $region30: #{node_emb_forward.6} parent=0 // pred_check
    _
  $region31: #{node_emb_forward.6} parent=0 // pred_check_branch
    %37 = sbr.rel (0) target = $region33
  $region32: #{node_emb_forward.6} parent=0 // pred_region
    _
  $region33: #{node_emb_forward.6} parent=0 // pred_fallthru
    _
  // Predicated region
  $region34: #{node_emb_forward.6} parent=0 // pred_check
    _
  $region35: #{node_emb_forward.6} parent=0 // pred_check_branch
    %39 = sbr.rel (0) target = $region37
  $region36: #{node_emb_forward.6} parent=0 // pred_region
    _
  $region37: #{node_emb_forward.6} parent=0 // pred_fallthru
    _
  // Predicated region
  $region38: #{node_emb_forward.6} parent=0 // pred_check
    _
  $region39: #{node_emb_forward.6} parent=0 // pred_check_branch
    %41 = sbr.rel (0) target = $region41
  $region40: #{node_emb_forward.6} parent=0 // pred_region
    _
  $region41: #{node_emb_forward.6} parent=0 // pred_fallthru
    _
  // Predicated region
  $region42: #{node_emb_forward.6} parent=0 // pred_check
    _
  $region43: #{node_emb_forward.6} parent=0 // pred_check_branch
    %43 = sbr.rel (0) target = $region45
  $region44: #{node_emb_forward.6} parent=0 // pred_region
    _
  $region45: #{node_emb_forward.6} parent=0 // pred_fallthru
    _
  // Predicated region
  $region46: #{node_emb_forward.6} parent=0 // pred_check
    _
  $region47: #{node_emb_forward.6} parent=0 // pred_check_branch
    %45 = sbr.rel (0) target = $region49
  $region48: #{node_emb_forward.6} parent=0 // pred_region
    _
  $region49: #{node_emb_forward.6} parent=0 // pred_fallthru
    _
  // Predicated region
  $region50: #{node_emb_forward.6} parent=0 // pred_check
    _
  $region51: #{node_emb_forward.6} parent=0 // pred_check_branch
    %47 = sbr.rel (0) target = $region53
  $region52: #{node_emb_forward.6} parent=0 // pred_region
    _
  $region53: #{node_emb_forward.6} parent=0 // pred_fallthru
    _
  // Predicated region
  $region54: #{node_emb_forward.6} parent=0 // pred_check
    _
  $region55: #{node_emb_forward.6} parent=0 // pred_check_branch
    %49 = sbr.rel (0) target = $region57
  $region56: #{node_emb_forward.6} parent=0 // pred_region
    _
  $region57: #{node_emb_forward.6} parent=0 // pred_fallthru
    _
  // Predicated region
  $region58: #{node_emb_forward.6} parent=0 // pred_check
    _
  $region59: #{node_emb_forward.6} parent=0 // pred_check_branch
    %51 = sbr.rel (0) target = $region61
  $region60: #{node_emb_forward.6} parent=0 // pred_region
    _
  $region61: #{node_emb_forward.6} parent=0 // pred_fallthru
    _
  %v52 = vld [vmem:[%s0] sm:$0xff]
  %v53 = vld [vmem:[%s1] sm:$0x1]
  %v55 = vlaneseq
  %v56 = vshrl.u32 %v55, 7
  %v57 = vsub.s32 0, %v56
  %v58 = vrot.slane %v53, %v57
  %v60 = vmul.f32 %v52, %v58
  %v61 = vld [vmem:[%s2] sm:$0x1]
  %v63 = vlaneseq
  %v64 = vshrl.u32 %v63, 7
  %v65 = vsub.s32 0, %v64
  %v66 = vrot.slane %v61, %v65
  %v68 = vadd.f32 %v60, %v66
  %v69 = vmax.f32 %v68, 0.0
  %v70 = vld [vmem:[%s3] sm:$0xff]
  %v71 = vld [vmem:[%s4] sm:$0x1]
  %v73 = vlaneseq
  %v74 = vshrl.u32 %v73, 7
  %v75 = vsub.s32 0, %v74
  %v76 = vrot.slane %v71, %v75
  %v78 = vmul.f32 %v70, %v76
  %v79 = vld [vmem:[%s5] sm:$0x1]
  %v81 = vlaneseq
  %v82 = vshrl.u32 %v81, 7
  %v83 = vsub.s32 0, %v82
  %v84 = vrot.slane %v79, %v83
  %v86 = vadd.f32 %v78, %v84
  %v87 = vmax.f32 %v86, 0.0
  %v88 = vld [vmem:[%s6] sm:$0xff]
  %v89 = vld [vmem:[%s6 + $0x8] sm:$0xff]
  %v90 = vld [vmem:[%s6 + $0x10] sm:$0xff]
  %v91 = vld [vmem:[%s6 + $0x18] sm:$0xff]
  %v92 = vld [vmem:[%s6 + $0x20] sm:$0xff]
  %v93 = vld [vmem:[%s6 + $0x28] sm:$0xff]
  %v94 = vld [vmem:[%s6 + $0x30] sm:$0xff]
  %v95 = vld [vmem:[%s6 + $0x38] sm:$0xff]
  %v96 = vld [vmem:[%s6 + $0x40] sm:$0xff]
  %v97 = vld [vmem:[%s6 + $0x48] sm:$0xff]
  %v98 = vld [vmem:[%s6 + $0x50] sm:$0xff]
  %v99 = vld [vmem:[%s6 + $0x58] sm:$0xff]
  %v100 = vld [vmem:[%s6 + $0x60] sm:$0xff]
  %v101 = vld [vmem:[%s6 + $0x68] sm:$0xff]
  %v102 = vld [vmem:[%s6 + $0x70] sm:$0xff]
  %v103 = vld [vmem:[%s6 + $0x78] sm:$0xff]
  %v104 = vld [vmem:[%s7] sm:$0xff]
  %v105 = vld [vmem:[%s7 + $0x8] sm:$0xff]
  %v106 = vld [vmem:[%s7 + $0x10] sm:$0xff]
  %v107 = vld [vmem:[%s7 + $0x18] sm:$0xff]
  %v108 = vld [vmem:[%s7 + $0x20] sm:$0xff]
  %v109 = vld [vmem:[%s7 + $0x28] sm:$0xff]
  %v110 = vld [vmem:[%s7 + $0x30] sm:$0xff]
  %v111 = vld [vmem:[%s7 + $0x38] sm:$0xff]
  %v112 = vld [vmem:[%s7 + $0x40] sm:$0xff]
  %v113 = vld [vmem:[%s7 + $0x48] sm:$0xff]
  %v114 = vld [vmem:[%s7 + $0x50] sm:$0xff]
  %v115 = vld [vmem:[%s7 + $0x58] sm:$0xff]
  %v116 = vld [vmem:[%s7 + $0x60] sm:$0xff]
  %v117 = vld [vmem:[%s7 + $0x68] sm:$0xff]
  %v118 = vld [vmem:[%s7 + $0x70] sm:$0xff]
  %v119 = vld [vmem:[%s7 + $0x78] sm:$0xff]
  %120 = vmatprep.subr.mxu0 0.0
  %121 = vmatpush1.msra.mxu0 %v104
  %122 = vmatprep.subr.mxu0 0.0
  %123 = vmatpush1.msra.mxu0 %v105
  %124 = vmatprep.subr.mxu0 0.0
  %125 = vmatpush1.msra.mxu0 %v106
  %126 = vmatprep.subr.mxu0 0.0
  %127 = vmatpush1.msra.mxu0 %v107
  %128 = vmatprep.subr.mxu0 0.0
  %129 = vmatpush1.msra.mxu0 %v108
  %130 = vmatprep.subr.mxu0 0.0
  %131 = vmatpush1.msra.mxu0 %v109
  %132 = vmatprep.subr.mxu0 0.0
  %133 = vmatpush1.msra.mxu0 %v110
  %134 = vmatprep.subr.mxu0 0.0
  %135 = vmatpush1.msra.mxu0 %v111
  %136 = vmatprep.subr.mxu0 0.0
  %137 = vmatpush1.msra.mxu0 %v112
  %138 = vmatprep.subr.mxu0 0.0
  %139 = vmatpush1.msra.mxu0 %v113
  %140 = vmatprep.subr.mxu0 0.0
  %141 = vmatpush1.msra.mxu0 %v114
  %142 = vmatprep.subr.mxu0 0.0
  %143 = vmatpush1.msra.mxu0 %v115
  %144 = vmatprep.subr.mxu0 0.0
  %145 = vmatpush1.msra.mxu0 %v116
  %146 = vmatprep.subr.mxu0 0.0
  %147 = vmatpush1.msra.mxu0 %v117
  %148 = vmatprep.subr.mxu0 0.0
  %149 = vmatpush1.msra.mxu0 %v118
  %150 = vmatprep.subr.mxu0 0.0
  %151 = vmatpush1.msra.mxu0 %v119
  %152 = vmatprep.subr.mxu0 0.0
  %153 = vmatpush1.msra.mxu0 0.0
  %154 = vmatprep.subr.mxu0 0.0
  %155 = vmatpush1.msra.mxu0 0.0
  %156 = vmatprep.subr.mxu0 0.0
  %157 = vmatpush1.msra.mxu0 0.0
  %158 = vmatprep.subr.mxu0 0.0
  %159 = vmatpush1.msra.mxu0 0.0
  %160 = vmatprep.subr.mxu0 0.0
  %161 = vmatpush1.msra.mxu0 0.0
  %162 = vmatprep.subr.mxu0 0.0
  %163 = vmatpush1.msra.mxu0 0.0
  %164 = vmatprep.subr.mxu0 0.0
  %165 = vmatpush1.msra.mxu0 0.0
  %166 = vmatprep.subr.mxu0 0.0
  %167 = vmatpush1.msra.mxu0 0.0
  %168 = vmatprep.subr.mxu0 0.0
  %169 = vmatpush1.msra.mxu0 0.0
  %170 = vmatprep.subr.mxu0 0.0
  %171 = vmatpush1.msra.mxu0 0.0
  %172 = vmatprep.subr.mxu0 0.0
  %173 = vmatpush1.msra.mxu0 0.0
  %174 = vmatprep.subr.mxu0 0.0
  %175 = vmatpush1.msra.mxu0 0.0
  %176 = vmatprep.subr.mxu0 0.0
  %177 = vmatpush1.msra.mxu0 0.0
  %178 = vmatprep.subr.mxu0 0.0
  %179 = vmatpush1.msra.mxu0 0.0
  %180 = vmatprep.subr.mxu0 0.0
  %181 = vmatpush1.msra.mxu0 0.0
  %182 = vmatprep.subr.mxu0 0.0
  %183 = vmatpush1.msra.mxu0 0.0
  %184 = vmatprep.mubr.f32.mxu0 0.0
  %185 = vmatmul.mubr.f32.gmra.mrb[0].mxu0 %v87
  %v186 = vpop.f32.mrb[0].mxu0
  %v187 = vadd.f32 0.0, %v186
  %v188 = vpop.f32.mrb[0].mxu0
  %189 = vdwg.mxu0
  %190 = vmatprep.subr.mxu0 0.0
  %191 = vmatpush1.msra.mxu0 %v88
  %192 = vmatprep.subr.mxu0 0.0
  %193 = vmatpush1.msra.mxu0 %v89
  %194 = vmatprep.subr.mxu0 0.0
  %195 = vmatpush1.msra.mxu0 %v90
  %196 = vmatprep.subr.mxu0 0.0
  %197 = vmatpush1.msra.mxu0 %v91
  %198 = vmatprep.subr.mxu0 0.0
  %199 = vmatpush1.msra.mxu0 %v92
  %200 = vmatprep.subr.mxu0 0.0
  %201 = vmatpush1.msra.mxu0 %v93
  %202 = vmatprep.subr.mxu0 0.0
  %203 = vmatpush1.msra.mxu0 %v94
  %204 = vmatprep.subr.mxu0 0.0
  %205 = vmatpush1.msra.mxu0 %v95
  %206 = vmatprep.subr.mxu0 0.0
  %207 = vmatpush1.msra.mxu0 %v96
  %208 = vmatprep.subr.mxu0 0.0
  %209 = vmatpush1.msra.mxu0 %v97
  %210 = vmatprep.subr.mxu0 0.0
  %211 = vmatpush1.msra.mxu0 %v98
  %212 = vmatprep.subr.mxu0 0.0
  %213 = vmatpush1.msra.mxu0 %v99
  %214 = vmatprep.subr.mxu0 0.0
  %215 = vmatpush1.msra.mxu0 %v100
  %216 = vmatprep.subr.mxu0 0.0
  %217 = vmatpush1.msra.mxu0 %v101
  %218 = vmatprep.subr.mxu0 0.0
  %219 = vmatpush1.msra.mxu0 %v102
  %220 = vmatprep.subr.mxu0 0.0
  %221 = vmatpush1.msra.mxu0 %v103
  %222 = vmatprep.subr.mxu0 0.0
  %223 = vmatpush1.msra.mxu0 0.0
  %224 = vmatprep.subr.mxu0 0.0
  %225 = vmatpush1.msra.mxu0 0.0
  %226 = vmatprep.subr.mxu0 0.0
  %227 = vmatpush1.msra.mxu0 0.0
  %228 = vmatprep.subr.mxu0 0.0
  %229 = vmatpush1.msra.mxu0 0.0
  %230 = vmatprep.subr.mxu0 0.0
  %231 = vmatpush1.msra.mxu0 0.0
  %232 = vmatprep.subr.mxu0 0.0
  %233 = vmatpush1.msra.mxu0 0.0
  %234 = vmatprep.subr.mxu0 0.0
  %235 = vmatpush1.msra.mxu0 0.0
  %236 = vmatprep.subr.mxu0 0.0
  %237 = vmatpush1.msra.mxu0 0.0
  %238 = vmatprep.subr.mxu0 0.0
  %239 = vmatpush1.msra.mxu0 0.0
  %240 = vmatprep.subr.mxu0 0.0
  %241 = vmatpush1.msra.mxu0 0.0
  %242 = vmatprep.subr.mxu0 0.0
  %243 = vmatpush1.msra.mxu0 0.0
  %244 = vmatprep.subr.mxu0 0.0
  %245 = vmatpush1.msra.mxu0 0.0
  %246 = vmatprep.subr.mxu0 0.0
  %247 = vmatpush1.msra.mxu0 0.0
  %248 = vmatprep.subr.mxu0 0.0
  %249 = vmatpush1.msra.mxu0 0.0
  %250 = vmatprep.subr.mxu0 0.0
  %251 = vmatpush1.msra.mxu0 0.0
  %252 = vmatprep.subr.mxu0 0.0
  %253 = vmatpush1.msra.mxu0 0.0
  %254 = vmatprep.mubr.f32.mxu0 0.0
  %255 = vmatmul.mubr.f32.gmra.mrb[0].mxu0 %v69
  %v256 = vpop.f32.mrb[0].mxu0
  %v257 = vadd.f32 %v187, %v256
  %v258 = vpop.f32.mrb[0].mxu0
  %259 = vdwg.mxu0
  %v260 = vld [vmem:[%s8] sm:$0x1]
  %v262 = vlaneseq
  %v263 = vshrl.u32 %v262, 7
  %v264 = vsub.s32 0, %v263
  %v265 = vrot.slane %v260, %v264
  %v267 = vadd.f32 %v257, %v265
  %v268 = vmax.f32 %v267, 0.0
  %v269 = vld [vmem:[%s9] sm:$0xff]
  %v270 = vld [vmem:[%s9 + $0x8] sm:$0xff]
  %v271 = vld [vmem:[%s9 + $0x10] sm:$0xff]
  %v272 = vld [vmem:[%s9 + $0x18] sm:$0xff]
  %v273 = vld [vmem:[%s9 + $0x20] sm:$0xff]
  %v274 = vld [vmem:[%s9 + $0x28] sm:$0xff]
  %v275 = vld [vmem:[%s9 + $0x30] sm:$0xff]
  %v276 = vld [vmem:[%s9 + $0x38] sm:$0xff]
  %v277 = vld [vmem:[%s9 + $0x40] sm:$0xff]
  %v278 = vld [vmem:[%s9 + $0x48] sm:$0xff]
  %v279 = vld [vmem:[%s9 + $0x50] sm:$0xff]
  %v280 = vld [vmem:[%s9 + $0x58] sm:$0xff]
  %v281 = vld [vmem:[%s9 + $0x60] sm:$0xff]
  %v282 = vld [vmem:[%s9 + $0x68] sm:$0xff]
  %v283 = vld [vmem:[%s9 + $0x70] sm:$0xff]
  %v284 = vld [vmem:[%s9 + $0x78] sm:$0xff]
  %v285 = vld [vmem:[%s11] sm:$0x1]
  %v287 = vlaneseq
  %v288 = vshrl.u32 %v287, 7
  %v289 = vsub.s32 0, %v288
  %v290 = vrot.slane %v285, %v289
  %292 = vmatprep.subr.mxu0 0.0
  %293 = vmatpush1.msra.mxu0 %v269
  %294 = vmatprep.subr.mxu0 0.0
  %295 = vmatpush1.msra.mxu0 %v270
  %296 = vmatprep.subr.mxu0 0.0
  %297 = vmatpush1.msra.mxu0 %v271
  %298 = vmatprep.subr.mxu0 0.0
  %299 = vmatpush1.msra.mxu0 %v272
  %300 = vmatprep.subr.mxu0 0.0
  %301 = vmatpush1.msra.mxu0 %v273
  %302 = vmatprep.subr.mxu0 0.0
  %303 = vmatpush1.msra.mxu0 %v274
  %304 = vmatprep.subr.mxu0 0.0
  %305 = vmatpush1.msra.mxu0 %v275
  %306 = vmatprep.subr.mxu0 0.0
  %307 = vmatpush1.msra.mxu0 %v276
  %308 = vmatprep.subr.mxu0 0.0
  %309 = vmatpush1.msra.mxu0 %v277
  %310 = vmatprep.subr.mxu0 0.0
  %311 = vmatpush1.msra.mxu0 %v278
  %312 = vmatprep.subr.mxu0 0.0
  %313 = vmatpush1.msra.mxu0 %v279
  %314 = vmatprep.subr.mxu0 0.0
  %315 = vmatpush1.msra.mxu0 %v280
  %316 = vmatprep.subr.mxu0 0.0
  %317 = vmatpush1.msra.mxu0 %v281
  %318 = vmatprep.subr.mxu0 0.0
  %319 = vmatpush1.msra.mxu0 %v282
  %320 = vmatprep.subr.mxu0 0.0
  %321 = vmatpush1.msra.mxu0 %v283
  %322 = vmatprep.subr.mxu0 0.0
  %323 = vmatpush1.msra.mxu0 %v284
  %324 = vmatprep.subr.mxu0 0.0
  %325 = vmatpush1.msra.mxu0 0.0
  %326 = vmatprep.subr.mxu0 0.0
  %327 = vmatpush1.msra.mxu0 0.0
  %328 = vmatprep.subr.mxu0 0.0
  %329 = vmatpush1.msra.mxu0 0.0
  %330 = vmatprep.subr.mxu0 0.0
  %331 = vmatpush1.msra.mxu0 0.0
  %332 = vmatprep.subr.mxu0 0.0
  %333 = vmatpush1.msra.mxu0 0.0
  %334 = vmatprep.subr.mxu0 0.0
  %335 = vmatpush1.msra.mxu0 0.0
  %336 = vmatprep.subr.mxu0 0.0
  %337 = vmatpush1.msra.mxu0 0.0
  %338 = vmatprep.subr.mxu0 0.0
  %339 = vmatpush1.msra.mxu0 0.0
  %340 = vmatprep.subr.mxu0 0.0
  %341 = vmatpush1.msra.mxu0 0.0
  %342 = vmatprep.subr.mxu0 0.0
  %343 = vmatpush1.msra.mxu0 0.0
  %344 = vmatprep.subr.mxu0 0.0
  %345 = vmatpush1.msra.mxu0 0.0
  %346 = vmatprep.subr.mxu0 0.0
  %347 = vmatpush1.msra.mxu0 0.0
  %348 = vmatprep.subr.mxu0 0.0
  %349 = vmatpush1.msra.mxu0 0.0
  %350 = vmatprep.subr.mxu0 0.0
  %351 = vmatpush1.msra.mxu0 0.0
  %352 = vmatprep.subr.mxu0 0.0
  %353 = vmatpush1.msra.mxu0 0.0
  %354 = vmatprep.subr.mxu0 0.0
  %355 = vmatpush1.msra.mxu0 0.0
  %356 = vmatprep.mubr.f32.mxu0 0.0
  %357 = vmatmul.mubr.f32.gmra.mrb[0].mxu0 %v268
  %v358 = vpop.f32.mrb[0].mxu0
  %v359 = vadd.f32 %v290, %v358
  %v360 = vpop.f32.mrb[0].mxu0
  %361 = vdwg.mxu0
  %v362 = vxor.u32 %v359, 2147483648
  %v363 = vmul.f32 %v362, 1.442695
  %v364 = vpow.pop %v363
  %v365 = vadd.f32 %v364, 1.0
  %v366 = vrcp.pop %v365
  %v367 = vmul.f32 1.0, %v366
  %v368 = vld [vmem:[%s10] sm:$0xff]
  %v369 = vld [vmem:[%s10 + $0x8] sm:$0xff]
  %v370 = vld [vmem:[%s10 + $0x10] sm:$0xff]
  %v371 = vld [vmem:[%s10 + $0x18] sm:$0xff]
  %v372 = vld [vmem:[%s10 + $0x20] sm:$0xff]
  %v373 = vld [vmem:[%s10 + $0x28] sm:$0xff]
  %v374 = vld [vmem:[%s10 + $0x30] sm:$0xff]
  %v375 = vld [vmem:[%s10 + $0x38] sm:$0xff]
  %v376 = vld [vmem:[%s10 + $0x40] sm:$0xff]
  %v377 = vld [vmem:[%s10 + $0x48] sm:$0xff]
  %v378 = vld [vmem:[%s10 + $0x50] sm:$0xff]
  %v379 = vld [vmem:[%s10 + $0x58] sm:$0xff]
  %v380 = vld [vmem:[%s10 + $0x60] sm:$0xff]
  %v381 = vld [vmem:[%s10 + $0x68] sm:$0xff]
  %v382 = vld [vmem:[%s10 + $0x70] sm:$0xff]
  %v383 = vld [vmem:[%s10 + $0x78] sm:$0xff]
  %v384 = vld [vmem:[%s12] sm:$0x1]
  %v386 = vlaneseq
  %v387 = vshrl.u32 %v386, 7
  %v388 = vsub.s32 0, %v387
  %v389 = vrot.slane %v384, %v388
  %391 = vmatprep.subr.mxu0 0.0
  %392 = vmatpush1.msra.mxu0 %v368
  %393 = vmatprep.subr.mxu0 0.0
  %394 = vmatpush1.msra.mxu0 %v369
  %395 = vmatprep.subr.mxu0 0.0
  %396 = vmatpush1.msra.mxu0 %v370
  %397 = vmatprep.subr.mxu0 0.0
  %398 = vmatpush1.msra.mxu0 %v371
  %399 = vmatprep.subr.mxu0 0.0
  %400 = vmatpush1.msra.mxu0 %v372
  %401 = vmatprep.subr.mxu0 0.0
  %402 = vmatpush1.msra.mxu0 %v373
  %403 = vmatprep.subr.mxu0 0.0
  %404 = vmatpush1.msra.mxu0 %v374
  %405 = vmatprep.subr.mxu0 0.0
  %406 = vmatpush1.msra.mxu0 %v375
  %407 = vmatprep.subr.mxu0 0.0
  %408 = vmatpush1.msra.mxu0 %v376
  %409 = vmatprep.subr.mxu0 0.0
  %410 = vmatpush1.msra.mxu0 %v377
  %411 = vmatprep.subr.mxu0 0.0
  %412 = vmatpush1.msra.mxu0 %v378
  %413 = vmatprep.subr.mxu0 0.0
  %414 = vmatpush1.msra.mxu0 %v379
  %415 = vmatprep.subr.mxu0 0.0
  %416 = vmatpush1.msra.mxu0 %v380
  %417 = vmatprep.subr.mxu0 0.0
  %418 = vmatpush1.msra.mxu0 %v381
  %419 = vmatprep.subr.mxu0 0.0
  %420 = vmatpush1.msra.mxu0 %v382
  %421 = vmatprep.subr.mxu0 0.0
  %422 = vmatpush1.msra.mxu0 %v383
  %423 = vmatprep.subr.mxu0 0.0
  %424 = vmatpush1.msra.mxu0 0.0
  %425 = vmatprep.subr.mxu0 0.0
  %426 = vmatpush1.msra.mxu0 0.0
  %427 = vmatprep.subr.mxu0 0.0
  %428 = vmatpush1.msra.mxu0 0.0
  %429 = vmatprep.subr.mxu0 0.0
  %430 = vmatpush1.msra.mxu0 0.0
  %431 = vmatprep.subr.mxu0 0.0
  %432 = vmatpush1.msra.mxu0 0.0
  %433 = vmatprep.subr.mxu0 0.0
  %434 = vmatpush1.msra.mxu0 0.0
  %435 = vmatprep.subr.mxu0 0.0
  %436 = vmatpush1.msra.mxu0 0.0
  %437 = vmatprep.subr.mxu0 0.0
  %438 = vmatpush1.msra.mxu0 0.0
  %439 = vmatprep.subr.mxu0 0.0
  %440 = vmatpush1.msra.mxu0 0.0
  %441 = vmatprep.subr.mxu0 0.0
  %442 = vmatpush1.msra.mxu0 0.0
  %443 = vmatprep.subr.mxu0 0.0
  %444 = vmatpush1.msra.mxu0 0.0
  %445 = vmatprep.subr.mxu0 0.0
  %446 = vmatpush1.msra.mxu0 0.0
  %447 = vmatprep.subr.mxu0 0.0
  %448 = vmatpush1.msra.mxu0 0.0
  %449 = vmatprep.subr.mxu0 0.0
  %450 = vmatpush1.msra.mxu0 0.0
  %451 = vmatprep.subr.mxu0 0.0
  %452 = vmatpush1.msra.mxu0 0.0
  %453 = vmatprep.subr.mxu0 0.0
  %454 = vmatpush1.msra.mxu0 0.0
  %455 = vmatprep.mubr.f32.mxu0 0.0
  %456 = vmatmul.mubr.f32.gmra.mrb[0].mxu0 %v268
  %v457 = vpop.f32.mrb[0].mxu0
  %v458 = vadd.f32 %v389, %v457
  %v459 = vpop.f32.mrb[0].mxu0
  %460 = vdwg.mxu0
  %v461 = vxor.u32 %v458, 2147483648
  %v462 = vmul.f32 %v461, 1.442695
  %v463 = vpow.pop %v462
  %v464 = vadd.f32 %v463, 1.0
  %v465 = vrcp.pop %v464
  %v466 = vmul.f32 1.0, %v465
  %v467 = vmul.f32 %v367, %v69
  %v468 = vmul.f32 %v466, %v87
  %v469 = vld [vmem:[%s13] sm:$0xff]
  %v470 = vld [vmem:[%s13 + $0x8] sm:$0xff]
  %v471 = vld [vmem:[%s13 + $0x10] sm:$0xff]
  %v472 = vld [vmem:[%s13 + $0x18] sm:$0xff]
  %v473 = vld [vmem:[%s13 + $0x20] sm:$0xff]
  %v474 = vld [vmem:[%s13 + $0x28] sm:$0xff]
  %v475 = vld [vmem:[%s13 + $0x30] sm:$0xff]
  %v476 = vld [vmem:[%s13 + $0x38] sm:$0xff]
  %v477 = vld [vmem:[%s13 + $0x40] sm:$0xff]
  %v478 = vld [vmem:[%s13 + $0x48] sm:$0xff]
  %v479 = vld [vmem:[%s13 + $0x50] sm:$0xff]
  %v480 = vld [vmem:[%s13 + $0x58] sm:$0xff]
  %v481 = vld [vmem:[%s13 + $0x60] sm:$0xff]
  %v482 = vld [vmem:[%s13 + $0x68] sm:$0xff]
  %v483 = vld [vmem:[%s13 + $0x70] sm:$0xff]
  %v484 = vld [vmem:[%s13 + $0x78] sm:$0xff]
  %v485 = vld [vmem:[%s14] sm:$0xff]
  %v486 = vld [vmem:[%s14 + $0x8] sm:$0xff]
  %v487 = vld [vmem:[%s14 + $0x10] sm:$0xff]
  %v488 = vld [vmem:[%s14 + $0x18] sm:$0xff]
  %v489 = vld [vmem:[%s14 + $0x20] sm:$0xff]
  %v490 = vld [vmem:[%s14 + $0x28] sm:$0xff]
  %v491 = vld [vmem:[%s14 + $0x30] sm:$0xff]
  %v492 = vld [vmem:[%s14 + $0x38] sm:$0xff]
  %v493 = vld [vmem:[%s14 + $0x40] sm:$0xff]
  %v494 = vld [vmem:[%s14 + $0x48] sm:$0xff]
  %v495 = vld [vmem:[%s14 + $0x50] sm:$0xff]
  %v496 = vld [vmem:[%s14 + $0x58] sm:$0xff]
  %v497 = vld [vmem:[%s14 + $0x60] sm:$0xff]
  %v498 = vld [vmem:[%s14 + $0x68] sm:$0xff]
  %v499 = vld [vmem:[%s14 + $0x70] sm:$0xff]
  %v500 = vld [vmem:[%s14 + $0x78] sm:$0xff]
  %501 = vmatprep.subr.mxu0 0.0
  %502 = vmatpush1.msra.mxu0 %v485
  %503 = vmatprep.subr.mxu0 0.0
  %504 = vmatpush1.msra.mxu0 %v486
  %505 = vmatprep.subr.mxu0 0.0
  %506 = vmatpush1.msra.mxu0 %v487
  %507 = vmatprep.subr.mxu0 0.0
  %508 = vmatpush1.msra.mxu0 %v488
  %509 = vmatprep.subr.mxu0 0.0
  %510 = vmatpush1.msra.mxu0 %v489
  %511 = vmatprep.subr.mxu0 0.0
  %512 = vmatpush1.msra.mxu0 %v490
  %513 = vmatprep.subr.mxu0 0.0
  %514 = vmatpush1.msra.mxu0 %v491
  %515 = vmatprep.subr.mxu0 0.0
  %516 = vmatpush1.msra.mxu0 %v492
  %517 = vmatprep.subr.mxu0 0.0
  %518 = vmatpush1.msra.mxu0 %v493
  %519 = vmatprep.subr.mxu0 0.0
  %520 = vmatpush1.msra.mxu0 %v494
  %521 = vmatprep.subr.mxu0 0.0
  %522 = vmatpush1.msra.mxu0 %v495
  %523 = vmatprep.subr.mxu0 0.0
  %524 = vmatpush1.msra.mxu0 %v496
  %525 = vmatprep.subr.mxu0 0.0
  %526 = vmatpush1.msra.mxu0 %v497
  %527 = vmatprep.subr.mxu0 0.0
  %528 = vmatpush1.msra.mxu0 %v498
  %529 = vmatprep.subr.mxu0 0.0
  %530 = vmatpush1.msra.mxu0 %v499
  %531 = vmatprep.subr.mxu0 0.0
  %532 = vmatpush1.msra.mxu0 %v500
  %533 = vmatprep.subr.mxu0 0.0
  %534 = vmatpush1.msra.mxu0 0.0
  %535 = vmatprep.subr.mxu0 0.0
  %536 = vmatpush1.msra.mxu0 0.0
  %537 = vmatprep.subr.mxu0 0.0
  %538 = vmatpush1.msra.mxu0 0.0
  %539 = vmatprep.subr.mxu0 0.0
  %540 = vmatpush1.msra.mxu0 0.0
  %541 = vmatprep.subr.mxu0 0.0
  %542 = vmatpush1.msra.mxu0 0.0
  %543 = vmatprep.subr.mxu0 0.0
  %544 = vmatpush1.msra.mxu0 0.0
  %545 = vmatprep.subr.mxu0 0.0
  %546 = vmatpush1.msra.mxu0 0.0
  %547 = vmatprep.subr.mxu0 0.0
  %548 = vmatpush1.msra.mxu0 0.0
  %549 = vmatprep.subr.mxu0 0.0
  %550 = vmatpush1.msra.mxu0 0.0
  %551 = vmatprep.subr.mxu0 0.0
  %552 = vmatpush1.msra.mxu0 0.0
  %553 = vmatprep.subr.mxu0 0.0
  %554 = vmatpush1.msra.mxu0 0.0
  %555 = vmatprep.subr.mxu0 0.0
  %556 = vmatpush1.msra.mxu0 0.0
  %557 = vmatprep.subr.mxu0 0.0
  %558 = vmatpush1.msra.mxu0 0.0
  %559 = vmatprep.subr.mxu0 0.0
  %560 = vmatpush1.msra.mxu0 0.0
  %561 = vmatprep.subr.mxu0 0.0
  %562 = vmatpush1.msra.mxu0 0.0
  %563 = vmatprep.subr.mxu0 0.0
  %564 = vmatpush1.msra.mxu0 0.0
  %565 = vmatprep.mubr.f32.mxu0 0.0
  %566 = vmatmul.mubr.f32.gmra.mrb[0].mxu0 %v468
  %v567 = vpop.f32.mrb[0].mxu0
  %v568 = vadd.f32 0.0, %v567
  %v569 = vpop.f32.mrb[0].mxu0
  %570 = vdwg.mxu0
  %571 = vmatprep.subr.mxu0 0.0
  %572 = vmatpush1.msra.mxu0 %v469
  %573 = vmatprep.subr.mxu0 0.0
  %574 = vmatpush1.msra.mxu0 %v470
  %575 = vmatprep.subr.mxu0 0.0
  %576 = vmatpush1.msra.mxu0 %v471
  %577 = vmatprep.subr.mxu0 0.0
  %578 = vmatpush1.msra.mxu0 %v472
  %579 = vmatprep.subr.mxu0 0.0
  %580 = vmatpush1.msra.mxu0 %v473
  %581 = vmatprep.subr.mxu0 0.0
  %582 = vmatpush1.msra.mxu0 %v474
  %583 = vmatprep.subr.mxu0 0.0
  %584 = vmatpush1.msra.mxu0 %v475
  %585 = vmatprep.subr.mxu0 0.0
  %586 = vmatpush1.msra.mxu0 %v476
  %587 = vmatprep.subr.mxu0 0.0
  %588 = vmatpush1.msra.mxu0 %v477
  %589 = vmatprep.subr.mxu0 0.0
  %590 = vmatpush1.msra.mxu0 %v478
  %591 = vmatprep.subr.mxu0 0.0
  %592 = vmatpush1.msra.mxu0 %v479
  %593 = vmatprep.subr.mxu0 0.0
  %594 = vmatpush1.msra.mxu0 %v480
  %595 = vmatprep.subr.mxu0 0.0
  %596 = vmatpush1.msra.mxu0 %v481
  %597 = vmatprep.subr.mxu0 0.0
  %598 = vmatpush1.msra.mxu0 %v482
  %599 = vmatprep.subr.mxu0 0.0
  %600 = vmatpush1.msra.mxu0 %v483
  %601 = vmatprep.subr.mxu0 0.0
  %602 = vmatpush1.msra.mxu0 %v484
  %603 = vmatprep.subr.mxu0 0.0
  %604 = vmatpush1.msra.mxu0 0.0
  %605 = vmatprep.subr.mxu0 0.0
  %606 = vmatpush1.msra.mxu0 0.0
  %607 = vmatprep.subr.mxu0 0.0
  %608 = vmatpush1.msra.mxu0 0.0
  %609 = vmatprep.subr.mxu0 0.0
  %610 = vmatpush1.msra.mxu0 0.0
  %611 = vmatprep.subr.mxu0 0.0
  %612 = vmatpush1.msra.mxu0 0.0
  %613 = vmatprep.subr.mxu0 0.0
  %614 = vmatpush1.msra.mxu0 0.0
  %615 = vmatprep.subr.mxu0 0.0
  %616 = vmatpush1.msra.mxu0 0.0
  %617 = vmatprep.subr.mxu0 0.0
  %618 = vmatpush1.msra.mxu0 0.0
  %619 = vmatprep.subr.mxu0 0.0
  %620 = vmatpush1.msra.mxu0 0.0
  %621 = vmatprep.subr.mxu0 0.0
  %622 = vmatpush1.msra.mxu0 0.0
  %623 = vmatprep.subr.mxu0 0.0
  %624 = vmatpush1.msra.mxu0 0.0
  %625 = vmatprep.subr.mxu0 0.0
  %626 = vmatpush1.msra.mxu0 0.0
  %627 = vmatprep.subr.mxu0 0.0
  %628 = vmatpush1.msra.mxu0 0.0
  %629 = vmatprep.subr.mxu0 0.0
  %630 = vmatpush1.msra.mxu0 0.0
  %631 = vmatprep.subr.mxu0 0.0
  %632 = vmatpush1.msra.mxu0 0.0
  %633 = vmatprep.subr.mxu0 0.0
  %634 = vmatpush1.msra.mxu0 0.0
  %635 = vmatprep.mubr.f32.mxu0 0.0
  %636 = vmatmul.mubr.f32.gmra.mrb[0].mxu0 %v467
  %v637 = vpop.f32.mrb[0].mxu0
  %v638 = vadd.f32 %v568, %v637
  %v639 = vpop.f32.mrb[0].mxu0
  %640 = vdwg.mxu0
  %641 = vst [vmem:[%s15] sm:$0xff] %v638
  %s642 = smul.u32 0, 8
  %v643 = vlaneseq
  %v644 = vshrl.u32 %v643, 7
  %v645 = vstv %s642
  %v646 = vadd.s32 %v645, %v644
  %vm647 = vcmp.lt.s32.totalorder %v646, 8
  %v648 = vsel %vm647, 1, 0
  %vm649 = vcmp.eq.s32.totalorder %v648, 1
  %v650 = vsel %vm649, %v638, 0.0
  %v651 = vrot.slane %v650, 4
  %v652 = vadd.f32 %v650, %v651
  %v653 = vrot.slane %v652, 2
  %v654 = vadd.f32 %v652, %v653
  %v655 = vrot.slane %v654, 1
  %v656 = vadd.f32 %v654, %v655
  %v657 = vmul.f32 %v650, %v650
  %v658 = vrot.slane %v657, 4
  %v659 = vadd.f32 %v657, %v658
  %v660 = vrot.slane %v659, 2
  %v661 = vadd.f32 %v659, %v660
  %v662 = vrot.slane %v661, 1
  %v663 = vadd.f32 %v661, %v662
  %vm664 = vcmask 1040384
  %v665 = vsel %vm664, %v656, %v663
  %666 = vst [vmem:[%s16] sm:$0x3] %v665
  // Predicated region
  $region62: #{node_emb_forward.6} parent=0 // pred_check
    _
  $region63: #{node_emb_forward.6} parent=0 // pred_check_branch
    %668 = sbr.rel (0) target = $region65
  $region64: #{node_emb_forward.6} parent=0 // pred_region
    _
  $region65: #{node_emb_forward.6} parent=0 // pred_fallthru
    _
  // Predicated region
  $region66: #{node_emb_forward.6} parent=0 // pred_check
    _
  $region67: #{node_emb_forward.6} parent=0 // pred_check_branch
    %670 = sbr.rel (0) target = $region69
  $region68: #{node_emb_forward.6} parent=0 // pred_region
    _
  $region69: #{node_emb_forward.6} parent=0 // pred_fallthru
    _
  // Predicated region
  $region70: #{node_emb_forward.6} parent=0 // pred_check
    _
  $region71: #{node_emb_forward.6} parent=0 // pred_check_branch
    %672 = sbr.rel (0) target = $region73
  $region72: #{node_emb_forward.6} parent=0 // pred_region
    _
  $region73: #{node_emb_forward.6} parent=0 // pred_fallthru
    _
  // Predicated region
  $region74: #{node_emb_forward.6} parent=0 // pred_check
    _
  $region75: #{node_emb_forward.6} parent=0 // pred_check_branch
    %674 = sbr.rel (0) target = $region77
  $region76: #{node_emb_forward.6} parent=0 // pred_region
    _
  $region77: #{node_emb_forward.6} parent=0 // pred_fallthru
    _

</llo_original>
